<compile_context>
chip_gen: v7x
topology: tpu7x:2x2x1
jax: 0.10.0
libtpu: 0.0.40
codegen_flags: <defaults>
</compile_context>

<pallas_src>
import functools

import jax
import jax.numpy as jnp
from jax.experimental import pallas as pl
from jax.experimental.pallas import tpu as pltpu


def _tem_cnn_global_kernel(x_ref, w_ref, b_ref, o_ref, *,
                           cin, cout, ksize, t_out, negative_slope):
    # x_ref: (Cin, T, tm)        VMEM, M lane-dense
    # w_ref: (Cout*Cin*K,)       SMEM scalars, index = (o*Cin + c)*K + k
    # b_ref: (Cout,)             SMEM scalars
    # o_ref: (Cout, T_out, tm)   VMEM, M lane-dense
    tm = o_ref.shape[-1]

    # Load each input channel once; the temporal windows are small static
    # sublane slices, computed once and re-used across all output channels.
    xs = [x_ref[c] for c in range(cin)]                      # Cin x (T, tm)
    wins = [[xs[c][k:k + t_out, :] for k in range(ksize)]    # Cin x K x (T_out, tm)
            for c in range(cin)]

    for o in range(cout):
        acc = jnp.zeros((t_out, tm), jnp.float32)
        for c in range(cin):
            for k in range(ksize):
                w = w_ref[(o * cin + c) * ksize + k]          # scalar from SMEM
                acc = acc + w * wins[c][k]                    # VPU broadcast FMA
        acc = acc + b_ref[o]
        # Dropout = identity (eval mode); LeakyReLU.
        o_ref[o] = jnp.where(acc >= 0.0, acc, negative_slope * acc).astype(o_ref.dtype)


def _choose_tile_m(m, t, cin):
    """Lane-aligned (multiple of 128) M-tile.

    Target large tiles (up to 1024 lanes) to amortize the ~0.35us per-grid-step
    overhead, keep >= 2 grid tiles when M allows it (v7x dual TensorCore), and
    cap the x block at ~512 KiB so it stays well inside every generation's VMEM.
    """
    groups = -(-m // 128)                       # number of 128-lane groups
    if groups <= 1:
        return 128
    tile_groups = min(8, (groups + 1) // 2)     # <=1024 lanes, >=2 grid tiles
    budget_groups = max(1, (512 * 1024) // (t * cin * 4 * 128))
    tile_groups = max(1, min(tile_groups, budget_groups))
    return tile_groups * 128


def tem_cnn_global_forward(x, weight, bias, *, kernel_size, negative_slope=0.01):
    """x: (N, C_in, D, T, W) f32; weight: (C_out, C_in, 1, K, 1); bias: (C_out,)."""
    N, Cin, D, T, W = x.shape
    Cout = weight.shape[0]
    K = kernel_size
    T_out = T - K + 1
    M = N * D * W

    # Lane-dense layout: (N, Cin, D, T, W) -> (Cin, T, M) with M = N*D*W last.
    x_t = jnp.transpose(x, (1, 3, 0, 2, 4)).reshape(Cin, T, M)

    tm = _choose_tile_m(M, T, Cin)
    m_pad = -(-M // tm) * tm
    if m_pad != M:
        x_t = jnp.pad(x_t, ((0, 0), (0, 0), (0, m_pad - M)))
    grid = (m_pad // tm,)

    # Weights/bias as flat SMEM scalars.
    w_flat = weight[:, :, 0, :, 0].reshape(Cout * Cin * K).astype(jnp.float32)
    b_flat = bias.reshape(Cout).astype(jnp.float32)

    kern = functools.partial(
        _tem_cnn_global_kernel, cin=Cin, cout=Cout, ksize=K,
        t_out=T_out, negative_slope=negative_slope)

    out = pl.pallas_call(
        kern,
        out_shape=jax.ShapeDtypeStruct((Cout, T_out, m_pad), x.dtype),
        grid_spec=pltpu.PrefetchScalarGridSpec(
            num_scalar_prefetch=0,
            grid=grid,
            in_specs=[
                pl.BlockSpec((Cin, T, tm), lambda i: (0, 0, i)),
                pl.BlockSpec(memory_space=pltpu.MemorySpace.SMEM),
                pl.BlockSpec(memory_space=pltpu.MemorySpace.SMEM),
            ],
            out_specs=pl.BlockSpec((Cout, T_out, tm), lambda i: (0, 0, i)),
        ),
        compiler_params=pltpu.CompilerParams(
            dimension_semantics=("parallel",),
            vmem_limit_bytes=32 * 1024 * 1024,
        ),
    )(x_t, w_flat, b_flat)

    # (Cout, T_out, M) -> (Cout, T_out, N, D, W) -> NCDHW (N, Cout, D, T_out, W)
    out = out[:, :, :M].reshape(Cout, T_out, N, D, W)
    return jnp.transpose(out, (2, 0, 3, 1, 4))


def _reference_forward(x, weight, bias, *, kernel_size, negative_slope=0.01):
    # Pure-JAX reference of Conv3d([1,K,1], no pad) + LeakyReLU, for validation.
    N, Cin, D, T, W = x.shape
    Cout = weight.shape[0]
    K = kernel_size
    T_out = T - K + 1
    w = weight[:, :, 0, :, 0]  # (Cout, Cin, K)
    acc = jnp.zeros((N, Cout, D, T_out, W), jnp.float32)
    for k in range(K):
        xs = x[:, :, :, k:k + T_out, :]  # (N, Cin, D, T_out, W)
        acc = acc + jnp.einsum("ncdtw,oc->nodtw", xs, w[:, :, k])
    acc = acc + bias[None, :, None, None, None]
    return jnp.where(acc >= 0, acc, negative_slope * acc)


if __name__ == "__main__":
    # Small, module-consistent shapes: N=2, C_in=4, D=16 (regions), T=8 (time), W=4 (cats)
    N, Cin, D, T, W = 2, 4, 16, 8, 4
    Cout, K = 8, 3

    key = jax.random.PRNGKey(0)
    kx, kw, kb = jax.random.split(key, 3)

    x = jax.random.normal(kx, (N, Cin, D, T, W), dtype=jnp.float32)
    # Deterministic Conv3d parameter init (shape per nn.Conv3d(Cin, Cout, [1, K, 1])).
    fan_in = Cin * 1 * K * 1
    bound = 1.0 / (fan_in ** 0.5)
    weight = jax.random.uniform(kw, (Cout, Cin, 1, K, 1), jnp.float32, -bound, bound)
    bias = jax.random.uniform(kb, (Cout,), jnp.float32, -bound, bound)

    fwd = jax.jit(functools.partial(tem_cnn_global_forward, kernel_size=K))
    out = fwd(x, weight, bias)
    out = jax.block_until_ready(out)

    ref = _reference_forward(x, weight, bias, kernel_size=K)
    assert out.shape == (N, Cout, D, T - K + 1, W), out.shape
    assert jnp.allclose(out, ref, atol=1e-5, rtol=1e-5), "mismatch vs reference"

    print("KERNEL_OK")
</pallas_src>

<mosaic_0001>
module attributes {stable_mosaic.version = 11 : i64} {
  func.func @_tem_cnn_global_kernel(%arg0: i32, %arg1: memref<4x8x128xf32, #tpu.memory_space<vmem>>, %arg2: memref<96xf32, #tpu.memory_space<smem>>, %arg3: memref<8xf32, #tpu.memory_space<smem>>, %arg4: memref<8x6x128xf32, #tpu.memory_space<vmem>>) attributes {dimension_semantics = [#tpu.dimension_semantics<parallel>], iteration_bounds = array<i64: 1>, scalar_prefetch = 0 : i64, scratch_operands = 0 : i64, tpu.core_type = #tpu.core_type<tc>, window_params = [{transform_indices = @transform_0, window_bounds = array<i64: 4, 8, 128>}, {transform_indices = @transform_1, window_bounds = array<i64: 96>}, {transform_indices = @transform_2, window_bounds = array<i64: 8>}, {transform_indices = @transform_3, window_bounds = array<i64: 8, 6, 128>}]} {
    %c0 = arith.constant 0 : index
    %c0_0 = arith.constant 0 : index
    %c0_1 = arith.constant 0 : index
    %0 = vector.load %arg1[%c0, %c0_0, %c0_1] : memref<4x8x128xf32, #tpu.memory_space<vmem>>, vector<1x8x128xf32>
    %1 = vector.shape_cast %0 : vector<1x8x128xf32> to vector<8x128xf32>
    %c1 = arith.constant 1 : index
    %c0_2 = arith.constant 0 : index
    %c0_3 = arith.constant 0 : index
    %2 = vector.load %arg1[%c1, %c0_2, %c0_3] : memref<4x8x128xf32, #tpu.memory_space<vmem>>, vector<1x8x128xf32>
    %3 = vector.shape_cast %2 : vector<1x8x128xf32> to vector<8x128xf32>
    %c2 = arith.constant 2 : index
    %c0_4 = arith.constant 0 : index
    %c0_5 = arith.constant 0 : index
    %4 = vector.load %arg1[%c2, %c0_4, %c0_5] : memref<4x8x128xf32, #tpu.memory_space<vmem>>, vector<1x8x128xf32>
    %5 = vector.shape_cast %4 : vector<1x8x128xf32> to vector<8x128xf32>
    %c3 = arith.constant 3 : index
    %c0_6 = arith.constant 0 : index
    %c0_7 = arith.constant 0 : index
    %6 = vector.load %arg1[%c3, %c0_6, %c0_7] : memref<4x8x128xf32, #tpu.memory_space<vmem>>, vector<1x8x128xf32>
    %7 = vector.shape_cast %6 : vector<1x8x128xf32> to vector<8x128xf32>
    %8 = vector.extract_strided_slice %1 {offsets = [0, 0], sizes = [6, 128], strides = [1, 1]} : vector<8x128xf32> to vector<6x128xf32>
    %9 = vector.extract_strided_slice %1 {offsets = [1, 0], sizes = [6, 128], strides = [1, 1]} : vector<8x128xf32> to vector<6x128xf32>
    %10 = vector.extract_strided_slice %1 {offsets = [2, 0], sizes = [6, 128], strides = [1, 1]} : vector<8x128xf32> to vector<6x128xf32>
    %11 = vector.extract_strided_slice %3 {offsets = [0, 0], sizes = [6, 128], strides = [1, 1]} : vector<8x128xf32> to vector<6x128xf32>
    %12 = vector.extract_strided_slice %3 {offsets = [1, 0], sizes = [6, 128], strides = [1, 1]} : vector<8x128xf32> to vector<6x128xf32>
    %13 = vector.extract_strided_slice %3 {offsets = [2, 0], sizes = [6, 128], strides = [1, 1]} : vector<8x128xf32> to vector<6x128xf32>
    %14 = vector.extract_strided_slice %5 {offsets = [0, 0], sizes = [6, 128], strides = [1, 1]} : vector<8x128xf32> to vector<6x128xf32>
    %15 = vector.extract_strided_slice %5 {offsets = [1, 0], sizes = [6, 128], strides = [1, 1]} : vector<8x128xf32> to vector<6x128xf32>
    %16 = vector.extract_strided_slice %5 {offsets = [2, 0], sizes = [6, 128], strides = [1, 1]} : vector<8x128xf32> to vector<6x128xf32>
    %17 = vector.extract_strided_slice %7 {offsets = [0, 0], sizes = [6, 128], strides = [1, 1]} : vector<8x128xf32> to vector<6x128xf32>
    %18 = vector.extract_strided_slice %7 {offsets = [1, 0], sizes = [6, 128], strides = [1, 1]} : vector<8x128xf32> to vector<6x128xf32>
    %19 = vector.extract_strided_slice %7 {offsets = [2, 0], sizes = [6, 128], strides = [1, 1]} : vector<8x128xf32> to vector<6x128xf32>
    %cst = arith.constant 0.000000e+00 : f32
    %20 = vector.broadcast %cst : f32 to vector<6x128xf32>
    %c0_8 = arith.constant 0 : index
    %21 = memref.load %arg2[%c0_8] : memref<96xf32, #tpu.memory_space<smem>>
    %22 = vector.broadcast %21 : f32 to vector<6x128xf32>
    %23 = arith.mulf %22, %8 : vector<6x128xf32>
    %24 = arith.addf %20, %23 : vector<6x128xf32>
    %c1_9 = arith.constant 1 : index
    %25 = memref.load %arg2[%c1_9] : memref<96xf32, #tpu.memory_space<smem>>
    %26 = vector.broadcast %25 : f32 to vector<6x128xf32>
    %27 = arith.mulf %26, %9 : vector<6x128xf32>
    %28 = arith.addf %24, %27 : vector<6x128xf32>
    %c2_10 = arith.constant 2 : index
    %29 = memref.load %arg2[%c2_10] : memref<96xf32, #tpu.memory_space<smem>>
    %30 = vector.broadcast %29 : f32 to vector<6x128xf32>
    %31 = arith.mulf %30, %10 : vector<6x128xf32>
    %32 = arith.addf %28, %31 : vector<6x128xf32>
    %c3_11 = arith.constant 3 : index
    %33 = memref.load %arg2[%c3_11] : memref<96xf32, #tpu.memory_space<smem>>
    %34 = vector.broadcast %33 : f32 to vector<6x128xf32>
    %35 = arith.mulf %34, %11 : vector<6x128xf32>
    %36 = arith.addf %32, %35 : vector<6x128xf32>
    %c4 = arith.constant 4 : index
    %37 = memref.load %arg2[%c4] : memref<96xf32, #tpu.memory_space<smem>>
    %38 = vector.broadcast %37 : f32 to vector<6x128xf32>
    %39 = arith.mulf %38, %12 : vector<6x128xf32>
    %40 = arith.addf %36, %39 : vector<6x128xf32>
    %c5 = arith.constant 5 : index
    %41 = memref.load %arg2[%c5] : memref<96xf32, #tpu.memory_space<smem>>
    %42 = vector.broadcast %41 : f32 to vector<6x128xf32>
    %43 = arith.mulf %42, %13 : vector<6x128xf32>
    %44 = arith.addf %40, %43 : vector<6x128xf32>
    %c6 = arith.constant 6 : index
    %45 = memref.load %arg2[%c6] : memref<96xf32, #tpu.memory_space<smem>>
    %46 = vector.broadcast %45 : f32 to vector<6x128xf32>
    %47 = arith.mulf %46, %14 : vector<6x128xf32>
    %48 = arith.addf %44, %47 : vector<6x128xf32>
    %c7 = arith.constant 7 : index
    %49 = memref.load %arg2[%c7] : memref<96xf32, #tpu.memory_space<smem>>
    %50 = vector.broadcast %49 : f32 to vector<6x128xf32>
    %51 = arith.mulf %50, %15 : vector<6x128xf32>
    %52 = arith.addf %48, %51 : vector<6x128xf32>
    %c8 = arith.constant 8 : index
    %53 = memref.load %arg2[%c8] : memref<96xf32, #tpu.memory_space<smem>>
    %54 = vector.broadcast %53 : f32 to vector<6x128xf32>
    %55 = arith.mulf %54, %16 : vector<6x128xf32>
    %56 = arith.addf %52, %55 : vector<6x128xf32>
    %c9 = arith.constant 9 : index
    %57 = memref.load %arg2[%c9] : memref<96xf32, #tpu.memory_space<smem>>
    %58 = vector.broadcast %57 : f32 to vector<6x128xf32>
    %59 = arith.mulf %58, %17 : vector<6x128xf32>
    %60 = arith.addf %56, %59 : vector<6x128xf32>
    %c10 = arith.constant 10 : index
    %61 = memref.load %arg2[%c10] : memref<96xf32, #tpu.memory_space<smem>>
    %62 = vector.broadcast %61 : f32 to vector<6x128xf32>
    %63 = arith.mulf %62, %18 : vector<6x128xf32>
    %64 = arith.addf %60, %63 : vector<6x128xf32>
    %c11 = arith.constant 11 : index
    %65 = memref.load %arg2[%c11] : memref<96xf32, #tpu.memory_space<smem>>
    %66 = vector.broadcast %65 : f32 to vector<6x128xf32>
    %67 = arith.mulf %66, %19 : vector<6x128xf32>
    %68 = arith.addf %64, %67 : vector<6x128xf32>
    %c0_12 = arith.constant 0 : index
    %69 = memref.load %arg3[%c0_12] : memref<8xf32, #tpu.memory_space<smem>>
    %70 = vector.broadcast %69 : f32 to vector<6x128xf32>
    %71 = arith.addf %68, %70 : vector<6x128xf32>
    %cst_13 = arith.constant 0.000000e+00 : f32
    %72 = vector.broadcast %cst_13 : f32 to vector<6x128xf32>
    %73 = arith.cmpf oge, %71, %72 : vector<6x128xf32>
    %cst_14 = arith.constant 0.00999999977 : f32
    %74 = vector.broadcast %cst_14 : f32 to vector<6x128xf32>
    %75 = arith.mulf %74, %71 : vector<6x128xf32>
    %76 = arith.select %73, %71, %75 : vector<6x128xi1>, vector<6x128xf32>
    %c0_15 = arith.constant 0 : index
    %c0_16 = arith.constant 0 : index
    %c0_17 = arith.constant 0 : index
    %77 = vector.load %arg4[%c0_15, %c0_16, %c0_17] : memref<8x6x128xf32, #tpu.memory_space<vmem>>, vector<1x6x128xf32>
    %78 = vector.shape_cast %77 : vector<1x6x128xf32> to vector<6x128xf32>
    %79 = vector.shape_cast %76 : vector<6x128xf32> to vector<1x6x128xf32>
    tpu.vector_store %arg4[%c0_15, %c0_16, %c0_17], %79 {strides = array<i32>} : memref<8x6x128xf32, #tpu.memory_space<vmem>>, vector<1x6x128xf32>,
    %cst_18 = arith.constant 0.000000e+00 : f32
    %80 = vector.broadcast %cst_18 : f32 to vector<6x128xf32>
    %c12 = arith.constant 12 : index
    %81 = memref.load %arg2[%c12] : memref<96xf32, #tpu.memory_space<smem>>
    %82 = vector.broadcast %81 : f32 to vector<6x128xf32>
    %83 = arith.mulf %82, %8 : vector<6x128xf32>
    %84 = arith.addf %80, %83 : vector<6x128xf32>
    %c13 = arith.constant 13 : index
    %85 = memref.load %arg2[%c13] : memref<96xf32, #tpu.memory_space<smem>>
    %86 = vector.broadcast %85 : f32 to vector<6x128xf32>
    %87 = arith.mulf %86, %9 : vector<6x128xf32>
    %88 = arith.addf %84, %87 : vector<6x128xf32>
    %c14 = arith.constant 14 : index
    %89 = memref.load %arg2[%c14] : memref<96xf32, #tpu.memory_space<smem>>
    %90 = vector.broadcast %89 : f32 to vector<6x128xf32>
    %91 = arith.mulf %90, %10 : vector<6x128xf32>
    %92 = arith.addf %88, %91 : vector<6x128xf32>
    %c15 = arith.constant 15 : index
    %93 = memref.load %arg2[%c15] : memref<96xf32, #tpu.memory_space<smem>>
    %94 = vector.broadcast %93 : f32 to vector<6x128xf32>
    %95 = arith.mulf %94, %11 : vector<6x128xf32>
    %96 = arith.addf %92, %95 : vector<6x128xf32>
    %c16 = arith.constant 16 : index
    %97 = memref.load %arg2[%c16] : memref<96xf32, #tpu.memory_space<smem>>
    %98 = vector.broadcast %97 : f32 to vector<6x128xf32>
    %99 = arith.mulf %98, %12 : vector<6x128xf32>
    %100 = arith.addf %96, %99 : vector<6x128xf32>
    %c17 = arith.constant 17 : index
    %101 = memref.load %arg2[%c17] : memref<96xf32, #tpu.memory_space<smem>>
    %102 = vector.broadcast %101 : f32 to vector<6x128xf32>
    %103 = arith.mulf %102, %13 : vector<6x128xf32>
    %104 = arith.addf %100, %103 : vector<6x128xf32>
    %c18 = arith.constant 18 : index
    %105 = memref.load %arg2[%c18] : memref<96xf32, #tpu.memory_space<smem>>
    %106 = vector.broadcast %105 : f32 to vector<6x128xf32>
    %107 = arith.mulf %106, %14 : vector<6x128xf32>
    %108 = arith.addf %104, %107 : vector<6x128xf32>
    %c19 = arith.constant 19 : index
    %109 = memref.load %arg2[%c19] : memref<96xf32, #tpu.memory_space<smem>>
    %110 = vector.broadcast %109 : f32 to vector<6x128xf32>
    %111 = arith.mulf %110, %15 : vector<6x128xf32>
    %112 = arith.addf %108, %111 : vector<6x128xf32>
    %c20 = arith.constant 20 : index
    %113 = memref.load %arg2[%c20] : memref<96xf32, #tpu.memory_space<smem>>
    %114 = vector.broadcast %113 : f32 to vector<6x128xf32>
    %115 = arith.mulf %114, %16 : vector<6x128xf32>
    %116 = arith.addf %112, %115 : vector<6x128xf32>
    %c21 = arith.constant 21 : index
    %117 = memref.load %arg2[%c21] : memref<96xf32, #tpu.memory_space<smem>>
    %118 = vector.broadcast %117 : f32 to vector<6x128xf32>
    %119 = arith.mulf %118, %17 : vector<6x128xf32>
    %120 = arith.addf %116, %119 : vector<6x128xf32>
    %c22 = arith.constant 22 : index
    %121 = memref.load %arg2[%c22] : memref<96xf32, #tpu.memory_space<smem>>
    %122 = vector.broadcast %121 : f32 to vector<6x128xf32>
    %123 = arith.mulf %122, %18 : vector<6x128xf32>
    %124 = arith.addf %120, %123 : vector<6x128xf32>
    %c23 = arith.constant 23 : index
    %125 = memref.load %arg2[%c23] : memref<96xf32, #tpu.memory_space<smem>>
    %126 = vector.broadcast %125 : f32 to vector<6x128xf32>
    %127 = arith.mulf %126, %19 : vector<6x128xf32>
    %128 = arith.addf %124, %127 : vector<6x128xf32>
    %c1_19 = arith.constant 1 : index
    %129 = memref.load %arg3[%c1_19] : memref<8xf32, #tpu.memory_space<smem>>
    %130 = vector.broadcast %129 : f32 to vector<6x128xf32>
    %131 = arith.addf %128, %130 : vector<6x128xf32>
    %cst_20 = arith.constant 0.000000e+00 : f32
    %132 = vector.broadcast %cst_20 : f32 to vector<6x128xf32>
    %133 = arith.cmpf oge, %131, %132 : vector<6x128xf32>
    %cst_21 = arith.constant 0.00999999977 : f32
    %134 = vector.broadcast %cst_21 : f32 to vector<6x128xf32>
    %135 = arith.mulf %134, %131 : vector<6x128xf32>
    %136 = arith.select %133, %131, %135 : vector<6x128xi1>, vector<6x128xf32>
    %c1_22 = arith.constant 1 : index
    %c0_23 = arith.constant 0 : index
    %c0_24 = arith.constant 0 : index
    %137 = vector.load %arg4[%c1_22, %c0_23, %c0_24] : memref<8x6x128xf32, #tpu.memory_space<vmem>>, vector<1x6x128xf32>
    %138 = vector.shape_cast %137 : vector<1x6x128xf32> to vector<6x128xf32>
    %139 = vector.shape_cast %136 : vector<6x128xf32> to vector<1x6x128xf32>
    tpu.vector_store %arg4[%c1_22, %c0_23, %c0_24], %139 {strides = array<i32>} : memref<8x6x128xf32, #tpu.memory_space<vmem>>, vector<1x6x128xf32>,
    %cst_25 = arith.constant 0.000000e+00 : f32
    %140 = vector.broadcast %cst_25 : f32 to vector<6x128xf32>
    %c24 = arith.constant 24 : index
    %141 = memref.load %arg2[%c24] : memref<96xf32, #tpu.memory_space<smem>>
    %142 = vector.broadcast %141 : f32 to vector<6x128xf32>
    %143 = arith.mulf %142, %8 : vector<6x128xf32>
    %144 = arith.addf %140, %143 : vector<6x128xf32>
    %c25 = arith.constant 25 : index
    %145 = memref.load %arg2[%c25] : memref<96xf32, #tpu.memory_space<smem>>
    %146 = vector.broadcast %145 : f32 to vector<6x128xf32>
    %147 = arith.mulf %146, %9 : vector<6x128xf32>
    %148 = arith.addf %144, %147 : vector<6x128xf32>
    %c26 = arith.constant 26 : index
    %149 = memref.load %arg2[%c26] : memref<96xf32, #tpu.memory_space<smem>>
    %150 = vector.broadcast %149 : f32 to vector<6x128xf32>
    %151 = arith.mulf %150, %10 : vector<6x128xf32>
    %152 = arith.addf %148, %151 : vector<6x128xf32>
    %c27 = arith.constant 27 : index
    %153 = memref.load %arg2[%c27] : memref<96xf32, #tpu.memory_space<smem>>
    %154 = vector.broadcast %153 : f32 to vector<6x128xf32>
    %155 = arith.mulf %154, %11 : vector<6x128xf32>
    %156 = arith.addf %152, %155 : vector<6x128xf32>
    %c28 = arith.constant 28 : index
    %157 = memref.load %arg2[%c28] : memref<96xf32, #tpu.memory_space<smem>>
    %158 = vector.broadcast %157 : f32 to vector<6x128xf32>
    %159 = arith.mulf %158, %12 : vector<6x128xf32>
    %160 = arith.addf %156, %159 : vector<6x128xf32>
    %c29 = arith.constant 29 : index
    %161 = memref.load %arg2[%c29] : memref<96xf32, #tpu.memory_space<smem>>
    %162 = vector.broadcast %161 : f32 to vector<6x128xf32>
    %163 = arith.mulf %162, %13 : vector<6x128xf32>
    %164 = arith.addf %160, %163 : vector<6x128xf32>
    %c30 = arith.constant 30 : index
    %165 = memref.load %arg2[%c30] : memref<96xf32, #tpu.memory_space<smem>>
    %166 = vector.broadcast %165 : f32 to vector<6x128xf32>
    %167 = arith.mulf %166, %14 : vector<6x128xf32>
    %168 = arith.addf %164, %167 : vector<6x128xf32>
    %c31 = arith.constant 31 : index
    %169 = memref.load %arg2[%c31] : memref<96xf32, #tpu.memory_space<smem>>
    %170 = vector.broadcast %169 : f32 to vector<6x128xf32>
    %171 = arith.mulf %170, %15 : vector<6x128xf32>
    %172 = arith.addf %168, %171 : vector<6x128xf32>
    %c32 = arith.constant 32 : index
    %173 = memref.load %arg2[%c32] : memref<96xf32, #tpu.memory_space<smem>>
    %174 = vector.broadcast %173 : f32 to vector<6x128xf32>
    %175 = arith.mulf %174, %16 : vector<6x128xf32>
    %176 = arith.addf %172, %175 : vector<6x128xf32>
    %c33 = arith.constant 33 : index
    %177 = memref.load %arg2[%c33] : memref<96xf32, #tpu.memory_space<smem>>
    %178 = vector.broadcast %177 : f32 to vector<6x128xf32>
    %179 = arith.mulf %178, %17 : vector<6x128xf32>
    %180 = arith.addf %176, %179 : vector<6x128xf32>
    %c34 = arith.constant 34 : index
    %181 = memref.load %arg2[%c34] : memref<96xf32, #tpu.memory_space<smem>>
    %182 = vector.broadcast %181 : f32 to vector<6x128xf32>
    %183 = arith.mulf %182, %18 : vector<6x128xf32>
    %184 = arith.addf %180, %183 : vector<6x128xf32>
    %c35 = arith.constant 35 : index
    %185 = memref.load %arg2[%c35] : memref<96xf32, #tpu.memory_space<smem>>
    %186 = vector.broadcast %185 : f32 to vector<6x128xf32>
    %187 = arith.mulf %186, %19 : vector<6x128xf32>
    %188 = arith.addf %184, %187 : vector<6x128xf32>
    %c2_26 = arith.constant 2 : index
    %189 = memref.load %arg3[%c2_26] : memref<8xf32, #tpu.memory_space<smem>>
    %190 = vector.broadcast %189 : f32 to vector<6x128xf32>
    %191 = arith.addf %188, %190 : vector<6x128xf32>
    %cst_27 = arith.constant 0.000000e+00 : f32
    %192 = vector.broadcast %cst_27 : f32 to vector<6x128xf32>
    %193 = arith.cmpf oge, %191, %192 : vector<6x128xf32>
    %cst_28 = arith.constant 0.00999999977 : f32
    %194 = vector.broadcast %cst_28 : f32 to vector<6x128xf32>
    %195 = arith.mulf %194, %191 : vector<6x128xf32>
    %196 = arith.select %193, %191, %195 : vector<6x128xi1>, vector<6x128xf32>
    %c2_29 = arith.constant 2 : index
    %c0_30 = arith.constant 0 : index
    %c0_31 = arith.constant 0 : index
    %197 = vector.load %arg4[%c2_29, %c0_30, %c0_31] : memref<8x6x128xf32, #tpu.memory_space<vmem>>, vector<1x6x128xf32>
    %198 = vector.shape_cast %197 : vector<1x6x128xf32> to vector<6x128xf32>
    %199 = vector.shape_cast %196 : vector<6x128xf32> to vector<1x6x128xf32>
    tpu.vector_store %arg4[%c2_29, %c0_30, %c0_31], %199 {strides = array<i32>} : memref<8x6x128xf32, #tpu.memory_space<vmem>>, vector<1x6x128xf32>,
    %cst_32 = arith.constant 0.000000e+00 : f32
    %200 = vector.broadcast %cst_32 : f32 to vector<6x128xf32>
    %c36 = arith.constant 36 : index
    %201 = memref.load %arg2[%c36] : memref<96xf32, #tpu.memory_space<smem>>
    %202 = vector.broadcast %201 : f32 to vector<6x128xf32>
    %203 = arith.mulf %202, %8 : vector<6x128xf32>
    %204 = arith.addf %200, %203 : vector<6x128xf32>
    %c37 = arith.constant 37 : index
    %205 = memref.load %arg2[%c37] : memref<96xf32, #tpu.memory_space<smem>>
    %206 = vector.broadcast %205 : f32 to vector<6x128xf32>
    %207 = arith.mulf %206, %9 : vector<6x128xf32>
    %208 = arith.addf %204, %207 : vector<6x128xf32>
    %c38 = arith.constant 38 : index
    %209 = memref.load %arg2[%c38] : memref<96xf32, #tpu.memory_space<smem>>
    %210 = vector.broadcast %209 : f32 to vector<6x128xf32>
    %211 = arith.mulf %210, %10 : vector<6x128xf32>
    %212 = arith.addf %208, %211 : vector<6x128xf32>
    %c39 = arith.constant 39 : index
    %213 = memref.load %arg2[%c39] : memref<96xf32, #tpu.memory_space<smem>>
    %214 = vector.broadcast %213 : f32 to vector<6x128xf32>
    %215 = arith.mulf %214, %11 : vector<6x128xf32>
    %216 = arith.addf %212, %215 : vector<6x128xf32>
    %c40 = arith.constant 40 : index
    %217 = memref.load %arg2[%c40] : memref<96xf32, #tpu.memory_space<smem>>
    %218 = vector.broadcast %217 : f32 to vector<6x128xf32>
    %219 = arith.mulf %218, %12 : vector<6x128xf32>
    %220 = arith.addf %216, %219 : vector<6x128xf32>
    %c41 = arith.constant 41 : index
    %221 = memref.load %arg2[%c41] : memref<96xf32, #tpu.memory_space<smem>>
    %222 = vector.broadcast %221 : f32 to vector<6x128xf32>
    %223 = arith.mulf %222, %13 : vector<6x128xf32>
    %224 = arith.addf %220, %223 : vector<6x128xf32>
    %c42 = arith.constant 42 : index
    %225 = memref.load %arg2[%c42] : memref<96xf32, #tpu.memory_space<smem>>
    %226 = vector.broadcast %225 : f32 to vector<6x128xf32>
    %227 = arith.mulf %226, %14 : vector<6x128xf32>
    %228 = arith.addf %224, %227 : vector<6x128xf32>
    %c43 = arith.constant 43 : index
    %229 = memref.load %arg2[%c43] : memref<96xf32, #tpu.memory_space<smem>>
    %230 = vector.broadcast %229 : f32 to vector<6x128xf32>
    %231 = arith.mulf %230, %15 : vector<6x128xf32>
    %232 = arith.addf %228, %231 : vector<6x128xf32>
    %c44 = arith.constant 44 : index
    %233 = memref.load %arg2[%c44] : memref<96xf32, #tpu.memory_space<smem>>
    %234 = vector.broadcast %233 : f32 to vector<6x128xf32>
    %235 = arith.mulf %234, %16 : vector<6x128xf32>
    %236 = arith.addf %232, %235 : vector<6x128xf32>
    %c45 = arith.constant 45 : index
    %237 = memref.load %arg2[%c45] : memref<96xf32, #tpu.memory_space<smem>>
    %238 = vector.broadcast %237 : f32 to vector<6x128xf32>
    %239 = arith.mulf %238, %17 : vector<6x128xf32>
    %240 = arith.addf %236, %239 : vector<6x128xf32>
    %c46 = arith.constant 46 : index
    %241 = memref.load %arg2[%c46] : memref<96xf32, #tpu.memory_space<smem>>
    %242 = vector.broadcast %241 : f32 to vector<6x128xf32>
    %243 = arith.mulf %242, %18 : vector<6x128xf32>
    %244 = arith.addf %240, %243 : vector<6x128xf32>
    %c47 = arith.constant 47 : index
    %245 = memref.load %arg2[%c47] : memref<96xf32, #tpu.memory_space<smem>>
    %246 = vector.broadcast %245 : f32 to vector<6x128xf32>
    %247 = arith.mulf %246, %19 : vector<6x128xf32>
    %248 = arith.addf %244, %247 : vector<6x128xf32>
    %c3_33 = arith.constant 3 : index
    %249 = memref.load %arg3[%c3_33] : memref<8xf32, #tpu.memory_space<smem>>
    %250 = vector.broadcast %249 : f32 to vector<6x128xf32>
    %251 = arith.addf %248, %250 : vector<6x128xf32>
    %cst_34 = arith.constant 0.000000e+00 : f32
    %252 = vector.broadcast %cst_34 : f32 to vector<6x128xf32>
    %253 = arith.cmpf oge, %251, %252 : vector<6x128xf32>
    %cst_35 = arith.constant 0.00999999977 : f32
    %254 = vector.broadcast %cst_35 : f32 to vector<6x128xf32>
    %255 = arith.mulf %254, %251 : vector<6x128xf32>
    %256 = arith.select %253, %251, %255 : vector<6x128xi1>, vector<6x128xf32>
    %c3_36 = arith.constant 3 : index
    %c0_37 = arith.constant 0 : index
    %c0_38 = arith.constant 0 : index
    %257 = vector.load %arg4[%c3_36, %c0_37, %c0_38] : memref<8x6x128xf32, #tpu.memory_space<vmem>>, vector<1x6x128xf32>
    %258 = vector.shape_cast %257 : vector<1x6x128xf32> to vector<6x128xf32>
    %259 = vector.shape_cast %256 : vector<6x128xf32> to vector<1x6x128xf32>
    tpu.vector_store %arg4[%c3_36, %c0_37, %c0_38], %259 {strides = array<i32>} : memref<8x6x128xf32, #tpu.memory_space<vmem>>, vector<1x6x128xf32>,
    %cst_39 = arith.constant 0.000000e+00 : f32
    %260 = vector.broadcast %cst_39 : f32 to vector<6x128xf32>
    %c48 = arith.constant 48 : index
    %261 = memref.load %arg2[%c48] : memref<96xf32, #tpu.memory_space<smem>>
    %262 = vector.broadcast %261 : f32 to vector<6x128xf32>
    %263 = arith.mulf %262, %8 : vector<6x128xf32>
    %264 = arith.addf %260, %263 : vector<6x128xf32>
    %c49 = arith.constant 49 : index
    %265 = memref.load %arg2[%c49] : memref<96xf32, #tpu.memory_space<smem>>
    %266 = vector.broadcast %265 : f32 to vector<6x128xf32>
    %267 = arith.mulf %266, %9 : vector<6x128xf32>
    %268 = arith.addf %264, %267 : vector<6x128xf32>
    %c50 = arith.constant 50 : index
    %269 = memref.load %arg2[%c50] : memref<96xf32, #tpu.memory_space<smem>>
    %270 = vector.broadcast %269 : f32 to vector<6x128xf32>
    %271 = arith.mulf %270, %10 : vector<6x128xf32>
    %272 = arith.addf %268, %271 : vector<6x128xf32>
    %c51 = arith.constant 51 : index
    %273 = memref.load %arg2[%c51] : memref<96xf32, #tpu.memory_space<smem>>
    %274 = vector.broadcast %273 : f32 to vector<6x128xf32>
    %275 = arith.mulf %274, %11 : vector<6x128xf32>
    %276 = arith.addf %272, %275 : vector<6x128xf32>
    %c52 = arith.constant 52 : index
    %277 = memref.load %arg2[%c52] : memref<96xf32, #tpu.memory_space<smem>>
    %278 = vector.broadcast %277 : f32 to vector<6x128xf32>
    %279 = arith.mulf %278, %12 : vector<6x128xf32>
    %280 = arith.addf %276, %279 : vector<6x128xf32>
    %c53 = arith.constant 53 : index
    %281 = memref.load %arg2[%c53] : memref<96xf32, #tpu.memory_space<smem>>
    %282 = vector.broadcast %281 : f32 to vector<6x128xf32>
    %283 = arith.mulf %282, %13 : vector<6x128xf32>
    %284 = arith.addf %280, %283 : vector<6x128xf32>
    %c54 = arith.constant 54 : index
    %285 = memref.load %arg2[%c54] : memref<96xf32, #tpu.memory_space<smem>>
    %286 = vector.broadcast %285 : f32 to vector<6x128xf32>
    %287 = arith.mulf %286, %14 : vector<6x128xf32>
    %288 = arith.addf %284, %287 : vector<6x128xf32>
    %c55 = arith.constant 55 : index
    %289 = memref.load %arg2[%c55] : memref<96xf32, #tpu.memory_space<smem>>
    %290 = vector.broadcast %289 : f32 to vector<6x128xf32>
    %291 = arith.mulf %290, %15 : vector<6x128xf32>
    %292 = arith.addf %288, %291 : vector<6x128xf32>
    %c56 = arith.constant 56 : index
    %293 = memref.load %arg2[%c56] : memref<96xf32, #tpu.memory_space<smem>>
    %294 = vector.broadcast %293 : f32 to vector<6x128xf32>
    %295 = arith.mulf %294, %16 : vector<6x128xf32>
    %296 = arith.addf %292, %295 : vector<6x128xf32>
    %c57 = arith.constant 57 : index
    %297 = memref.load %arg2[%c57] : memref<96xf32, #tpu.memory_space<smem>>
    %298 = vector.broadcast %297 : f32 to vector<6x128xf32>
    %299 = arith.mulf %298, %17 : vector<6x128xf32>
    %300 = arith.addf %296, %299 : vector<6x128xf32>
    %c58 = arith.constant 58 : index
    %301 = memref.load %arg2[%c58] : memref<96xf32, #tpu.memory_space<smem>>
    %302 = vector.broadcast %301 : f32 to vector<6x128xf32>
    %303 = arith.mulf %302, %18 : vector<6x128xf32>
    %304 = arith.addf %300, %303 : vector<6x128xf32>
    %c59 = arith.constant 59 : index
    %305 = memref.load %arg2[%c59] : memref<96xf32, #tpu.memory_space<smem>>
    %306 = vector.broadcast %305 : f32 to vector<6x128xf32>
    %307 = arith.mulf %306, %19 : vector<6x128xf32>
    %308 = arith.addf %304, %307 : vector<6x128xf32>
    %c4_40 = arith.constant 4 : index
    %309 = memref.load %arg3[%c4_40] : memref<8xf32, #tpu.memory_space<smem>>
    %310 = vector.broadcast %309 : f32 to vector<6x128xf32>
    %311 = arith.addf %308, %310 : vector<6x128xf32>
    %cst_41 = arith.constant 0.000000e+00 : f32
    %312 = vector.broadcast %cst_41 : f32 to vector<6x128xf32>
    %313 = arith.cmpf oge, %311, %312 : vector<6x128xf32>
    %cst_42 = arith.constant 0.00999999977 : f32
    %314 = vector.broadcast %cst_42 : f32 to vector<6x128xf32>
    %315 = arith.mulf %314, %311 : vector<6x128xf32>
    %316 = arith.select %313, %311, %315 : vector<6x128xi1>, vector<6x128xf32>
    %c4_43 = arith.constant 4 : index
    %c0_44 = arith.constant 0 : index
    %c0_45 = arith.constant 0 : index
    %317 = vector.load %arg4[%c4_43, %c0_44, %c0_45] : memref<8x6x128xf32, #tpu.memory_space<vmem>>, vector<1x6x128xf32>
    %318 = vector.shape_cast %317 : vector<1x6x128xf32> to vector<6x128xf32>
    %319 = vector.shape_cast %316 : vector<6x128xf32> to vector<1x6x128xf32>
    tpu.vector_store %arg4[%c4_43, %c0_44, %c0_45], %319 {strides = array<i32>} : memref<8x6x128xf32, #tpu.memory_space<vmem>>, vector<1x6x128xf32>,
    %cst_46 = arith.constant 0.000000e+00 : f32
    %320 = vector.broadcast %cst_46 : f32 to vector<6x128xf32>
    %c60 = arith.constant 60 : index
    %321 = memref.load %arg2[%c60] : memref<96xf32, #tpu.memory_space<smem>>
    %322 = vector.broadcast %321 : f32 to vector<6x128xf32>
    %323 = arith.mulf %322, %8 : vector<6x128xf32>
    %324 = arith.addf %320, %323 : vector<6x128xf32>
    %c61 = arith.constant 61 : index
    %325 = memref.load %arg2[%c61] : memref<96xf32, #tpu.memory_space<smem>>
    %326 = vector.broadcast %325 : f32 to vector<6x128xf32>
    %327 = arith.mulf %326, %9 : vector<6x128xf32>
    %328 = arith.addf %324, %327 : vector<6x128xf32>
    %c62 = arith.constant 62 : index
    %329 = memref.load %arg2[%c62] : memref<96xf32, #tpu.memory_space<smem>>
    %330 = vector.broadcast %329 : f32 to vector<6x128xf32>
    %331 = arith.mulf %330, %10 : vector<6x128xf32>
    %332 = arith.addf %328, %331 : vector<6x128xf32>
    %c63 = arith.constant 63 : index
    %333 = memref.load %arg2[%c63] : memref<96xf32, #tpu.memory_space<smem>>
    %334 = vector.broadcast %333 : f32 to vector<6x128xf32>
    %335 = arith.mulf %334, %11 : vector<6x128xf32>
    %336 = arith.addf %332, %335 : vector<6x128xf32>
    %c64 = arith.constant 64 : index
    %337 = memref.load %arg2[%c64] : memref<96xf32, #tpu.memory_space<smem>>
    %338 = vector.broadcast %337 : f32 to vector<6x128xf32>
    %339 = arith.mulf %338, %12 : vector<6x128xf32>
    %340 = arith.addf %336, %339 : vector<6x128xf32>
    %c65 = arith.constant 65 : index
    %341 = memref.load %arg2[%c65] : memref<96xf32, #tpu.memory_space<smem>>
    %342 = vector.broadcast %341 : f32 to vector<6x128xf32>
    %343 = arith.mulf %342, %13 : vector<6x128xf32>
    %344 = arith.addf %340, %343 : vector<6x128xf32>
    %c66 = arith.constant 66 : index
    %345 = memref.load %arg2[%c66] : memref<96xf32, #tpu.memory_space<smem>>
    %346 = vector.broadcast %345 : f32 to vector<6x128xf32>
    %347 = arith.mulf %346, %14 : vector<6x128xf32>
    %348 = arith.addf %344, %347 : vector<6x128xf32>
    %c67 = arith.constant 67 : index
    %349 = memref.load %arg2[%c67] : memref<96xf32, #tpu.memory_space<smem>>
    %350 = vector.broadcast %349 : f32 to vector<6x128xf32>
    %351 = arith.mulf %350, %15 : vector<6x128xf32>
    %352 = arith.addf %348, %351 : vector<6x128xf32>
    %c68 = arith.constant 68 : index
    %353 = memref.load %arg2[%c68] : memref<96xf32, #tpu.memory_space<smem>>
    %354 = vector.broadcast %353 : f32 to vector<6x128xf32>
    %355 = arith.mulf %354, %16 : vector<6x128xf32>
    %356 = arith.addf %352, %355 : vector<6x128xf32>
    %c69 = arith.constant 69 : index
    %357 = memref.load %arg2[%c69] : memref<96xf32, #tpu.memory_space<smem>>
    %358 = vector.broadcast %357 : f32 to vector<6x128xf32>
    %359 = arith.mulf %358, %17 : vector<6x128xf32>
    %360 = arith.addf %356, %359 : vector<6x128xf32>
    %c70 = arith.constant 70 : index
    %361 = memref.load %arg2[%c70] : memref<96xf32, #tpu.memory_space<smem>>
    %362 = vector.broadcast %361 : f32 to vector<6x128xf32>
    %363 = arith.mulf %362, %18 : vector<6x128xf32>
    %364 = arith.addf %360, %363 : vector<6x128xf32>
    %c71 = arith.constant 71 : index
    %365 = memref.load %arg2[%c71] : memref<96xf32, #tpu.memory_space<smem>>
    %366 = vector.broadcast %365 : f32 to vector<6x128xf32>
    %367 = arith.mulf %366, %19 : vector<6x128xf32>
    %368 = arith.addf %364, %367 : vector<6x128xf32>
    %c5_47 = arith.constant 5 : index
    %369 = memref.load %arg3[%c5_47] : memref<8xf32, #tpu.memory_space<smem>>
    %370 = vector.broadcast %369 : f32 to vector<6x128xf32>
    %371 = arith.addf %368, %370 : vector<6x128xf32>
    %cst_48 = arith.constant 0.000000e+00 : f32
    %372 = vector.broadcast %cst_48 : f32 to vector<6x128xf32>
    %373 = arith.cmpf oge, %371, %372 : vector<6x128xf32>
    %cst_49 = arith.constant 0.00999999977 : f32
    %374 = vector.broadcast %cst_49 : f32 to vector<6x128xf32>
    %375 = arith.mulf %374, %371 : vector<6x128xf32>
    %376 = arith.select %373, %371, %375 : vector<6x128xi1>, vector<6x128xf32>
    %c5_50 = arith.constant 5 : index
    %c0_51 = arith.constant 0 : index
    %c0_52 = arith.constant 0 : index
    %377 = vector.load %arg4[%c5_50, %c0_51, %c0_52] : memref<8x6x128xf32, #tpu.memory_space<vmem>>, vector<1x6x128xf32>
    %378 = vector.shape_cast %377 : vector<1x6x128xf32> to vector<6x128xf32>
    %379 = vector.shape_cast %376 : vector<6x128xf32> to vector<1x6x128xf32>
    tpu.vector_store %arg4[%c5_50, %c0_51, %c0_52], %379 {strides = array<i32>} : memref<8x6x128xf32, #tpu.memory_space<vmem>>, vector<1x6x128xf32>,
    %cst_53 = arith.constant 0.000000e+00 : f32
    %380 = vector.broadcast %cst_53 : f32 to vector<6x128xf32>
    %c72 = arith.constant 72 : index
    %381 = memref.load %arg2[%c72] : memref<96xf32, #tpu.memory_space<smem>>
    %382 = vector.broadcast %381 : f32 to vector<6x128xf32>
    %383 = arith.mulf %382, %8 : vector<6x128xf32>
    %384 = arith.addf %380, %383 : vector<6x128xf32>
    %c73 = arith.constant 73 : index
    %385 = memref.load %arg2[%c73] : memref<96xf32, #tpu.memory_space<smem>>
    %386 = vector.broadcast %385 : f32 to vector<6x128xf32>
    %387 = arith.mulf %386, %9 : vector<6x128xf32>
    %388 = arith.addf %384, %387 : vector<6x128xf32>
    %c74 = arith.constant 74 : index
    %389 = memref.load %arg2[%c74] : memref<96xf32, #tpu.memory_space<smem>>
    %390 = vector.broadcast %389 : f32 to vector<6x128xf32>
    %391 = arith.mulf %390, %10 : vector<6x128xf32>
    %392 = arith.addf %388, %391 : vector<6x128xf32>
    %c75 = arith.constant 75 : index
    %393 = memref.load %arg2[%c75] : memref<96xf32, #tpu.memory_space<smem>>
    %394 = vector.broadcast %393 : f32 to vector<6x128xf32>
    %395 = arith.mulf %394, %11 : vector<6x128xf32>
    %396 = arith.addf %392, %395 : vector<6x128xf32>
    %c76 = arith.constant 76 : index
    %397 = memref.load %arg2[%c76] : memref<96xf32, #tpu.memory_space<smem>>
    %398 = vector.broadcast %397 : f32 to vector<6x128xf32>
    %399 = arith.mulf %398, %12 : vector<6x128xf32>
    %400 = arith.addf %396, %399 : vector<6x128xf32>
    %c77 = arith.constant 77 : index
    %401 = memref.load %arg2[%c77] : memref<96xf32, #tpu.memory_space<smem>>
    %402 = vector.broadcast %401 : f32 to vector<6x128xf32>
    %403 = arith.mulf %402, %13 : vector<6x128xf32>
    %404 = arith.addf %400, %403 : vector<6x128xf32>
    %c78 = arith.constant 78 : index
    %405 = memref.load %arg2[%c78] : memref<96xf32, #tpu.memory_space<smem>>
    %406 = vector.broadcast %405 : f32 to vector<6x128xf32>
    %407 = arith.mulf %406, %14 : vector<6x128xf32>
    %408 = arith.addf %404, %407 : vector<6x128xf32>
    %c79 = arith.constant 79 : index
    %409 = memref.load %arg2[%c79] : memref<96xf32, #tpu.memory_space<smem>>
    %410 = vector.broadcast %409 : f32 to vector<6x128xf32>
    %411 = arith.mulf %410, %15 : vector<6x128xf32>
    %412 = arith.addf %408, %411 : vector<6x128xf32>
    %c80 = arith.constant 80 : index
    %413 = memref.load %arg2[%c80] : memref<96xf32, #tpu.memory_space<smem>>
    %414 = vector.broadcast %413 : f32 to vector<6x128xf32>
    %415 = arith.mulf %414, %16 : vector<6x128xf32>
    %416 = arith.addf %412, %415 : vector<6x128xf32>
    %c81 = arith.constant 81 : index
    %417 = memref.load %arg2[%c81] : memref<96xf32, #tpu.memory_space<smem>>
    %418 = vector.broadcast %417 : f32 to vector<6x128xf32>
    %419 = arith.mulf %418, %17 : vector<6x128xf32>
    %420 = arith.addf %416, %419 : vector<6x128xf32>
    %c82 = arith.constant 82 : index
    %421 = memref.load %arg2[%c82] : memref<96xf32, #tpu.memory_space<smem>>
    %422 = vector.broadcast %421 : f32 to vector<6x128xf32>
    %423 = arith.mulf %422, %18 : vector<6x128xf32>
    %424 = arith.addf %420, %423 : vector<6x128xf32>
    %c83 = arith.constant 83 : index
    %425 = memref.load %arg2[%c83] : memref<96xf32, #tpu.memory_space<smem>>
    %426 = vector.broadcast %425 : f32 to vector<6x128xf32>
    %427 = arith.mulf %426, %19 : vector<6x128xf32>
    %428 = arith.addf %424, %427 : vector<6x128xf32>
    %c6_54 = arith.constant 6 : index
    %429 = memref.load %arg3[%c6_54] : memref<8xf32, #tpu.memory_space<smem>>
    %430 = vector.broadcast %429 : f32 to vector<6x128xf32>
    %431 = arith.addf %428, %430 : vector<6x128xf32>
    %cst_55 = arith.constant 0.000000e+00 : f32
    %432 = vector.broadcast %cst_55 : f32 to vector<6x128xf32>
    %433 = arith.cmpf oge, %431, %432 : vector<6x128xf32>
    %cst_56 = arith.constant 0.00999999977 : f32
    %434 = vector.broadcast %cst_56 : f32 to vector<6x128xf32>
    %435 = arith.mulf %434, %431 : vector<6x128xf32>
    %436 = arith.select %433, %431, %435 : vector<6x128xi1>, vector<6x128xf32>
    %c6_57 = arith.constant 6 : index
    %c0_58 = arith.constant 0 : index
    %c0_59 = arith.constant 0 : index
    %437 = vector.load %arg4[%c6_57, %c0_58, %c0_59] : memref<8x6x128xf32, #tpu.memory_space<vmem>>, vector<1x6x128xf32>
    %438 = vector.shape_cast %437 : vector<1x6x128xf32> to vector<6x128xf32>
    %439 = vector.shape_cast %436 : vector<6x128xf32> to vector<1x6x128xf32>
    tpu.vector_store %arg4[%c6_57, %c0_58, %c0_59], %439 {strides = array<i32>} : memref<8x6x128xf32, #tpu.memory_space<vmem>>, vector<1x6x128xf32>,
    %cst_60 = arith.constant 0.000000e+00 : f32
    %440 = vector.broadcast %cst_60 : f32 to vector<6x128xf32>
    %c84 = arith.constant 84 : index
    %441 = memref.load %arg2[%c84] : memref<96xf32, #tpu.memory_space<smem>>
    %442 = vector.broadcast %441 : f32 to vector<6x128xf32>
    %443 = arith.mulf %442, %8 : vector<6x128xf32>
    %444 = arith.addf %440, %443 : vector<6x128xf32>
    %c85 = arith.constant 85 : index
    %445 = memref.load %arg2[%c85] : memref<96xf32, #tpu.memory_space<smem>>
    %446 = vector.broadcast %445 : f32 to vector<6x128xf32>
    %447 = arith.mulf %446, %9 : vector<6x128xf32>
    %448 = arith.addf %444, %447 : vector<6x128xf32>
    %c86 = arith.constant 86 : index
    %449 = memref.load %arg2[%c86] : memref<96xf32, #tpu.memory_space<smem>>
    %450 = vector.broadcast %449 : f32 to vector<6x128xf32>
    %451 = arith.mulf %450, %10 : vector<6x128xf32>
    %452 = arith.addf %448, %451 : vector<6x128xf32>
    %c87 = arith.constant 87 : index
    %453 = memref.load %arg2[%c87] : memref<96xf32, #tpu.memory_space<smem>>
    %454 = vector.broadcast %453 : f32 to vector<6x128xf32>
    %455 = arith.mulf %454, %11 : vector<6x128xf32>
    %456 = arith.addf %452, %455 : vector<6x128xf32>
    %c88 = arith.constant 88 : index
    %457 = memref.load %arg2[%c88] : memref<96xf32, #tpu.memory_space<smem>>
    %458 = vector.broadcast %457 : f32 to vector<6x128xf32>
    %459 = arith.mulf %458, %12 : vector<6x128xf32>
    %460 = arith.addf %456, %459 : vector<6x128xf32>
    %c89 = arith.constant 89 : index
    %461 = memref.load %arg2[%c89] : memref<96xf32, #tpu.memory_space<smem>>
    %462 = vector.broadcast %461 : f32 to vector<6x128xf32>
    %463 = arith.mulf %462, %13 : vector<6x128xf32>
    %464 = arith.addf %460, %463 : vector<6x128xf32>
    %c90 = arith.constant 90 : index
    %465 = memref.load %arg2[%c90] : memref<96xf32, #tpu.memory_space<smem>>
    %466 = vector.broadcast %465 : f32 to vector<6x128xf32>
    %467 = arith.mulf %466, %14 : vector<6x128xf32>
    %468 = arith.addf %464, %467 : vector<6x128xf32>
    %c91 = arith.constant 91 : index
    %469 = memref.load %arg2[%c91] : memref<96xf32, #tpu.memory_space<smem>>
    %470 = vector.broadcast %469 : f32 to vector<6x128xf32>
    %471 = arith.mulf %470, %15 : vector<6x128xf32>
    %472 = arith.addf %468, %471 : vector<6x128xf32>
    %c92 = arith.constant 92 : index
    %473 = memref.load %arg2[%c92] : memref<96xf32, #tpu.memory_space<smem>>
    %474 = vector.broadcast %473 : f32 to vector<6x128xf32>
    %475 = arith.mulf %474, %16 : vector<6x128xf32>
    %476 = arith.addf %472, %475 : vector<6x128xf32>
    %c93 = arith.constant 93 : index
    %477 = memref.load %arg2[%c93] : memref<96xf32, #tpu.memory_space<smem>>
    %478 = vector.broadcast %477 : f32 to vector<6x128xf32>
    %479 = arith.mulf %478, %17 : vector<6x128xf32>
    %480 = arith.addf %476, %479 : vector<6x128xf32>
    %c94 = arith.constant 94 : index
    %481 = memref.load %arg2[%c94] : memref<96xf32, #tpu.memory_space<smem>>
    %482 = vector.broadcast %481 : f32 to vector<6x128xf32>
    %483 = arith.mulf %482, %18 : vector<6x128xf32>
    %484 = arith.addf %480, %483 : vector<6x128xf32>
    %c95 = arith.constant 95 : index
    %485 = memref.load %arg2[%c95] : memref<96xf32, #tpu.memory_space<smem>>
    %486 = vector.broadcast %485 : f32 to vector<6x128xf32>
    %487 = arith.mulf %486, %19 : vector<6x128xf32>
    %488 = arith.addf %484, %487 : vector<6x128xf32>
    %c7_61 = arith.constant 7 : index
    %489 = memref.load %arg3[%c7_61] : memref<8xf32, #tpu.memory_space<smem>>
    %490 = vector.broadcast %489 : f32 to vector<6x128xf32>
    %491 = arith.addf %488, %490 : vector<6x128xf32>
    %cst_62 = arith.constant 0.000000e+00 : f32
    %492 = vector.broadcast %cst_62 : f32 to vector<6x128xf32>
    %493 = arith.cmpf oge, %491, %492 : vector<6x128xf32>
    %cst_63 = arith.constant 0.00999999977 : f32
    %494 = vector.broadcast %cst_63 : f32 to vector<6x128xf32>
    %495 = arith.mulf %494, %491 : vector<6x128xf32>
    %496 = arith.select %493, %491, %495 : vector<6x128xi1>, vector<6x128xf32>
    %c7_64 = arith.constant 7 : index
    %c0_65 = arith.constant 0 : index
    %c0_66 = arith.constant 0 : index
    %497 = vector.load %arg4[%c7_64, %c0_65, %c0_66] : memref<8x6x128xf32, #tpu.memory_space<vmem>>, vector<1x6x128xf32>
    %498 = vector.shape_cast %497 : vector<1x6x128xf32> to vector<6x128xf32>
    %499 = vector.shape_cast %496 : vector<6x128xf32> to vector<1x6x128xf32>
    tpu.vector_store %arg4[%c7_64, %c0_65, %c0_66], %499 {strides = array<i32>} : memref<8x6x128xf32, #tpu.memory_space<vmem>>, vector<1x6x128xf32>,
    return
  }
  func.func @transform_0(%arg0: i32) -> (i32, i32, i32) {
    %c0_i32 = arith.constant 0 : i32
    %c0_i32_0 = arith.constant 0 : i32
    %c0_i32_1 = arith.constant 0 : i32
    return %c0_i32, %c0_i32_0, %arg0 : i32, i32, i32
  }
  func.func @transform_1(%arg0: i32) -> i32 {
    %c0_i32 = arith.constant 0 : i32
    %c0_i32_0 = arith.constant 0 : i32
    return %c0_i32 : i32
  }
  func.func @transform_2(%arg0: i32) -> i32 {
    %c0_i32 = arith.constant 0 : i32
    %c0_i32_0 = arith.constant 0 : i32
    return %c0_i32 : i32
  }
  func.func @transform_3(%arg0: i32) -> (i32, i32, i32) {
    %c0_i32 = arith.constant 0 : i32
    %c0_i32_0 = arith.constant 0 : i32
    %c0_i32_1 = arith.constant 0 : i32
    return %c0_i32, %c0_i32_0, %arg0 : i32, i32, i32
  }
}

</mosaic_0001>

<llo_original>
// kernel: squeeze.1
$region0: #{squeeze.1}
  %s0 = inlined_call_operand.vmem [shape: f32[8,4,1,3,1], index: 0, kind: input, shape index: {}]
  %s1 = inlined_call_operand.vmem [shape: f32[96], index: 1, kind: output, shape index: {}]
  $region1: #{squeeze.1} parent=0
    #allocation0 [shape = 'u8[4096]{0}', space=vmem, size = 0x1000, scoped, tag = 'scoped mem for output reshape']
    #allocation1 [shape = 'u8[32768]{0}', space=vmem, size = 0x8000, scoped, tag = 'scoped mem for input reshape']
    %s3 = sshllo.u32 0, 4
    %s4 = smul.addr 4, 7
    %s5 = scalar_lea.vmem %s0, %s4
    %v6 = vld [vmem:[%s5] sm:%s3]
    %s7 = scalar_lea.vmem [#allocation1], 56
    %8 = vst [vmem:[%s7] sm:%s3] %v6
    %s9 = smul.addr 4, 6
    %s10 = scalar_lea.vmem %s0, %s9
    %v11 = vld [vmem:[%s10] sm:%s3]
    %s12 = scalar_lea.vmem [#allocation1], 48
    %13 = vst [vmem:[%s12] sm:%s3] %v11
    %s14 = smul.addr 4, 5
    %s15 = scalar_lea.vmem %s0, %s14
    %v16 = vld [vmem:[%s15] sm:%s3]
    %s17 = scalar_lea.vmem [#allocation1], 40
    %18 = vst [vmem:[%s17] sm:%s3] %v16
    %s19 = smul.addr 4, 4
    %s20 = scalar_lea.vmem %s0, %s19
    %v21 = vld [vmem:[%s20] sm:%s3]
    %s22 = scalar_lea.vmem [#allocation1], 32
    %23 = vst [vmem:[%s22] sm:%s3] %v21
    %s24 = smul.addr 4, 3
    %s25 = scalar_lea.vmem %s0, %s24
    %v26 = vld [vmem:[%s25] sm:%s3]
    %s27 = scalar_lea.vmem [#allocation1], 24
    %28 = vst [vmem:[%s27] sm:%s3] %v26
    %s29 = smul.addr 4, 2
    %s30 = scalar_lea.vmem %s0, %s29
    %v31 = vld [vmem:[%s30] sm:%s3]
    %s32 = scalar_lea.vmem [#allocation1], 16
    %33 = vst [vmem:[%s32] sm:%s3] %v31
    %s34 = scalar_lea.vmem %s0, 4
    %v35 = vld [vmem:[%s34] sm:%s3]
    %s36 = scalar_lea.vmem [#allocation1], 8
    %37 = vst [vmem:[%s36] sm:%s3] %v35
    %v38 = vld [vmem:[%s0] sm:%s3]
    %39 = vst [vmem:[#allocation1] sm:%s3] %v38
    %v40 = vld [vmem:[#allocation1] sm:$0x1]
    %vm41 = vcmask 23552
    %42 = vst.msk [vmem:[#allocation0] sm:$0x1] %vm41, %v40
    %s43 = scalar_lea.vmem [#allocation1], 59
    %v44 = vld [vmem:[%s43] sm:$0x1]
    %45 = vrot.lane.b32.xlu0 %v44, 93
    %v46 = vpop.permute.xlu0 %45
    %vm47 = vcmask 786152
    %48 = vst.msk [vmem:[#allocation0] sm:$0x1] %vm47, %v46
    %s49 = scalar_lea.vmem [#allocation1], 58
    %v50 = vld [vmem:[%s49] sm:$0x1]
    %51 = vrot.lane.b32.xlu0 %v50, 90
    %v52 = vpop.permute.xlu0 %51
    %vm53 = vcmask 761552
    %54 = vst.msk [vmem:[#allocation0] sm:$0x1] %vm53, %v52
    %s55 = scalar_lea.vmem [#allocation1], 57
    %v56 = vld [vmem:[%s55] sm:$0x1]
    %57 = vrot.lane.b32.xlu0 %v56, 87
    %v58 = vpop.permute.xlu0 %57
    %vm59 = vcmask 736952
    %60 = vst.msk [vmem:[#allocation0] sm:$0x1] %vm59, %v58
    %s61 = scalar_lea.vmem [#allocation1], 56
    %v62 = vld [vmem:[%s61] sm:$0x1]
    %63 = vrot.lane.b32.xlu0 %v62, 84
    %v64 = vpop.permute.xlu0 %63
    %vm65 = vcmask 712352
    %66 = vst.msk [vmem:[#allocation0] sm:$0x1] %vm65, %v64
    %s67 = scalar_lea.vmem [#allocation1], 51
    %v68 = vld [vmem:[%s67] sm:$0x1]
    %69 = vrot.lane.b32.xlu0 %v68, 81
    %v70 = vpop.permute.xlu0 %69
    %vm71 = vcmask 687752
    %72 = vst.msk [vmem:[#allocation0] sm:$0x1] %vm71, %v70
    %s73 = scalar_lea.vmem [#allocation1], 50
    %v74 = vld [vmem:[%s73] sm:$0x1]
    %75 = vrot.lane.b32.xlu0 %v74, 78
    %v76 = vpop.permute.xlu0 %75
    %vm77 = vcmask 663152
    %78 = vst.msk [vmem:[#allocation0] sm:$0x1] %vm77, %v76
    %s79 = scalar_lea.vmem [#allocation1], 49
    %v80 = vld [vmem:[%s79] sm:$0x1]
    %81 = vrot.lane.b32.xlu0 %v80, 75
    %v82 = vpop.permute.xlu0 %81
    %vm83 = vcmask 638552
    %84 = vst.msk [vmem:[#allocation0] sm:$0x1] %vm83, %v82
    %s85 = scalar_lea.vmem [#allocation1], 48
    %v86 = vld [vmem:[%s85] sm:$0x1]
    %87 = vrot.lane.b32.xlu0 %v86, 72
    %v88 = vpop.permute.xlu0 %87
    %vm89 = vcmask 613952
    %90 = vst.msk [vmem:[#allocation0] sm:$0x1] %vm89, %v88
    %s91 = scalar_lea.vmem [#allocation1], 43
    %v92 = vld [vmem:[%s91] sm:$0x1]
    %93 = vrot.lane.b32.xlu0 %v92, 69
    %v94 = vpop.permute.xlu0 %93
    %vm95 = vcmask 589352
    %96 = vst.msk [vmem:[#allocation0] sm:$0x1] %vm95, %v94
    %s97 = scalar_lea.vmem [#allocation1], 42
    %v98 = vld [vmem:[%s97] sm:$0x1]
    %99 = vrot.lane.b32.xlu0 %v98, 66
    %v100 = vpop.permute.xlu0 %99
    %vm101 = vcmask 564752
    %102 = vst.msk [vmem:[#allocation0] sm:$0x1] %vm101, %v100
    %s103 = scalar_lea.vmem [#allocation1], 41
    %v104 = vld [vmem:[%s103] sm:$0x1]
    %105 = vrot.lane.b32.xlu0 %v104, 63
    %v106 = vpop.permute.xlu0 %105
    %vm107 = vcmask 540152
    %108 = vst.msk [vmem:[#allocation0] sm:$0x1] %vm107, %v106
    %s109 = scalar_lea.vmem [#allocation1], 40
    %v110 = vld [vmem:[%s109] sm:$0x1]
    %111 = vrot.lane.b32.xlu0 %v110, 60
    %v112 = vpop.permute.xlu0 %111
    %vm113 = vcmask 515552
    %114 = vst.msk [vmem:[#allocation0] sm:$0x1] %vm113, %v112
    %s115 = scalar_lea.vmem [#allocation1], 35
    %v116 = vld [vmem:[%s115] sm:$0x1]
    %117 = vrot.lane.b32.xlu0 %v116, 57
    %v118 = vpop.permute.xlu0 %117
    %vm119 = vcmask 490952
    %120 = vst.msk [vmem:[#allocation0] sm:$0x1] %vm119, %v118
    %s121 = scalar_lea.vmem [#allocation1], 34
    %v122 = vld [vmem:[%s121] sm:$0x1]
    %123 = vrot.lane.b32.xlu0 %v122, 54
    %v124 = vpop.permute.xlu0 %123
    %vm125 = vcmask 466352
    %126 = vst.msk [vmem:[#allocation0] sm:$0x1] %vm125, %v124
    %s127 = scalar_lea.vmem [#allocation1], 33
    %v128 = vld [vmem:[%s127] sm:$0x1]
    %129 = vrot.lane.b32.xlu0 %v128, 51
    %v130 = vpop.permute.xlu0 %129
    %vm131 = vcmask 441752
    %132 = vst.msk [vmem:[#allocation0] sm:$0x1] %vm131, %v130
    %s133 = scalar_lea.vmem [#allocation1], 32
    %v134 = vld [vmem:[%s133] sm:$0x1]
    %135 = vrot.lane.b32.xlu0 %v134, 48
    %v136 = vpop.permute.xlu0 %135
    %vm137 = vcmask 417152
    %138 = vst.msk [vmem:[#allocation0] sm:$0x1] %vm137, %v136
    %s139 = scalar_lea.vmem [#allocation1], 27
    %v140 = vld [vmem:[%s139] sm:$0x1]
    %141 = vrot.lane.b32.xlu0 %v140, 45
    %v142 = vpop.permute.xlu0 %141
    %vm143 = vcmask 392552
    %144 = vst.msk [vmem:[#allocation0] sm:$0x1] %vm143, %v142
    %s145 = scalar_lea.vmem [#allocation1], 26
    %v146 = vld [vmem:[%s145] sm:$0x1]
    %147 = vrot.lane.b32.xlu0 %v146, 42
    %v148 = vpop.permute.xlu0 %147
    %vm149 = vcmask 367952
    %150 = vst.msk [vmem:[#allocation0] sm:$0x1] %vm149, %v148
    %s151 = scalar_lea.vmem [#allocation1], 25
    %v152 = vld [vmem:[%s151] sm:$0x1]
    %153 = vrot.lane.b32.xlu0 %v152, 39
    %v154 = vpop.permute.xlu0 %153
    %vm155 = vcmask 343352
    %156 = vst.msk [vmem:[#allocation0] sm:$0x1] %vm155, %v154
    %s157 = scalar_lea.vmem [#allocation1], 24
    %v158 = vld [vmem:[%s157] sm:$0x1]
    %159 = vrot.lane.b32.xlu0 %v158, 36
    %v160 = vpop.permute.xlu0 %159
    %vm161 = vcmask 318752
    %162 = vst.msk [vmem:[#allocation0] sm:$0x1] %vm161, %v160
    %s163 = scalar_lea.vmem [#allocation1], 19
    %v164 = vld [vmem:[%s163] sm:$0x1]
    %165 = vrot.lane.b32.xlu0 %v164, 33
    %v166 = vpop.permute.xlu0 %165
    %vm167 = vcmask 294152
    %168 = vst.msk [vmem:[#allocation0] sm:$0x1] %vm167, %v166
    %s169 = scalar_lea.vmem [#allocation1], 18
    %v170 = vld [vmem:[%s169] sm:$0x1]
    %171 = vrot.lane.b32.xlu0 %v170, 30
    %v172 = vpop.permute.xlu0 %171
    %vm173 = vcmask 269552
    %174 = vst.msk [vmem:[#allocation0] sm:$0x1] %vm173, %v172
    %s175 = scalar_lea.vmem [#allocation1], 17
    %v176 = vld [vmem:[%s175] sm:$0x1]
    %177 = vrot.lane.b32.xlu0 %v176, 27
    %v178 = vpop.permute.xlu0 %177
    %vm179 = vcmask 244952
    %180 = vst.msk [vmem:[#allocation0] sm:$0x1] %vm179, %v178
    %s181 = scalar_lea.vmem [#allocation1], 16
    %v182 = vld [vmem:[%s181] sm:$0x1]
    %183 = vrot.lane.b32.xlu0 %v182, 24
    %v184 = vpop.permute.xlu0 %183
    %vm185 = vcmask 220352
    %186 = vst.msk [vmem:[#allocation0] sm:$0x1] %vm185, %v184
    %s187 = scalar_lea.vmem [#allocation1], 11
    %v188 = vld [vmem:[%s187] sm:$0x1]
    %189 = vrot.lane.b32.xlu0 %v188, 21
    %v190 = vpop.permute.xlu0 %189
    %vm191 = vcmask 195752
    %192 = vst.msk [vmem:[#allocation0] sm:$0x1] %vm191, %v190
    %s193 = scalar_lea.vmem [#allocation1], 10
    %v194 = vld [vmem:[%s193] sm:$0x1]
    %195 = vrot.lane.b32.xlu0 %v194, 18
    %v196 = vpop.permute.xlu0 %195
    %vm197 = vcmask 171152
    %198 = vst.msk [vmem:[#allocation0] sm:$0x1] %vm197, %v196
    %s199 = scalar_lea.vmem [#allocation1], 9
    %v200 = vld [vmem:[%s199] sm:$0x1]
    %201 = vrot.lane.b32.xlu0 %v200, 15
    %v202 = vpop.permute.xlu0 %201
    %vm203 = vcmask 146552
    %204 = vst.msk [vmem:[#allocation0] sm:$0x1] %vm203, %v202
    %s205 = scalar_lea.vmem [#allocation1], 8
    %v206 = vld [vmem:[%s205] sm:$0x1]
    %207 = vrot.lane.b32.xlu0 %v206, 12
    %v208 = vpop.permute.xlu0 %207
    %vm209 = vcmask 121952
    %210 = vst.msk [vmem:[#allocation0] sm:$0x1] %vm209, %v208
    %s211 = scalar_lea.vmem [#allocation1], 3
    %v212 = vld [vmem:[%s211] sm:$0x1]
    %213 = vrot.lane.b32.xlu0 %v212, 9
    %v214 = vpop.permute.xlu0 %213
    %vm215 = vcmask 97352
    %216 = vst.msk [vmem:[#allocation0] sm:$0x1] %vm215, %v214
    %s217 = scalar_lea.vmem [#allocation1], 2
    %v218 = vld [vmem:[%s217] sm:$0x1]
    %219 = vrot.lane.b32.xlu0 %v218, 6
    %v220 = vpop.permute.xlu0 %219
    %vm221 = vcmask 72752
    %222 = vst.msk [vmem:[#allocation0] sm:$0x1] %vm221, %v220
    %s223 = scalar_lea.vmem [#allocation1], 1
    %v224 = vld [vmem:[%s223] sm:$0x1]
    %225 = vrot.lane.b32.xlu0 %v224, 3
    %v226 = vpop.permute.xlu0 %225
    %vm227 = vcmask 48152
    %228 = vst.msk [vmem:[#allocation0] sm:$0x1] %vm227, %v226
    %s230 = sshllo.u32 0, 1
    %v232 = vld [vmem:[#allocation0] sm:%s230]
    %s233 = sshllo.u32 0, 1
    %234 = vst [vmem:[%s1] sm:%s233] %v232

// kernel: tem_cnn_global_forward.1
$region0: #{tem_cnn_global_forward.1}
  #allocation0 [shape = 'u32[]', space=smem, size = 0x4, offset = 0x4, fixed_abs, tag = 'smem constant byte address 0x4 - core index']
  #allocation1 [shape = 'u32[144,128]{1,0:T(1,128)}', space=vmem, size = 0x12000, scoped, tag = 'internal scratch']
  %s0 = inlined_call_operand.vmem [shape: f32[4,8,128], index: 0, kind: input, shape index: {}]
  %s1 = inlined_call_operand.vmem [shape: f32[96], index: 1, kind: input, shape index: {}]
  %s2 = inlined_call_operand.vmem [shape: f32[8], index: 2, kind: input, shape index: {}]
  %s3 = inlined_call_operand.vmem [shape: f32[8,6,128], index: 3, kind: output, shape index: {}]
  %s4 = sld [smem:[#allocation0]]
  $region30: #{tem_cnn_global_forward.1} parent=0
    _
  %s6 = ssub.s32 1, %s4
  %s7 = scalar_select 0, %s6, %s4
  $region1: #{tem_cnn_global_forward.1} parent=0
    #allocation2 [shape = 'u8[512]{0}', space=smem, size = 0x200, scoped, tag = 'input window, operand 1, single buffered']
    #allocation3 [shape = 's32[1]{0}', space=sflag, size = 0x4, scoped, tag = 'scoped memory for tem_cnn_global_forward.1']
    #allocation4 [shape = 'u8[512]{0}', space=smem, size = 0x200, scoped, tag = 'input window, operand 2, single buffered']
    #allocation5 [shape = 's32[1]{0}', space=sflag, size = 0x4, scoped, tag = 'scoped memory for tem_cnn_global_forward.1']
    %8 = vsyncpa [#allocation3], 0
    %9 = vsyncpa [#allocation5], 0
    // Predicated region
    $region2: #{tem_cnn_global_forward.1} parent=1 // pred_check
      _
    $region3: #{tem_cnn_global_forward.1} parent=1 // pred_check_branch
      %11 = sbr.rel (0) target = $region5
    $region4: #{tem_cnn_global_forward.1} parent=1 // pred_region
      _
    $region5: #{tem_cnn_global_forward.1} parent=1 // pred_fallthru
      _
    // Predicated region
    $region6: #{tem_cnn_global_forward.1} parent=1 // pred_check
      _
    $region7: #{tem_cnn_global_forward.1} parent=1 // pred_check_branch
      %13 = sbr.rel (0) target = $region9
    $region8: #{tem_cnn_global_forward.1} parent=1 // pred_region
      %s15 = ssub.s32 16, 16
      %16 = vsyncadd [#allocation3], %s15
      %s18 = sshll.u32 %s1, 4
      %s19 = int_to_ptr.vmem [resolvable:$true] %s18
      %21 = dma.vmem_to_smem %s19, 16, [#allocation2], [#allocation3]
    $region9: #{tem_cnn_global_forward.1} parent=1 // pred_fallthru
      _
    // Predicated region
    $region10: #{tem_cnn_global_forward.1} parent=1 // pred_check
      _
    $region11: #{tem_cnn_global_forward.1} parent=1 // pred_check_branch
      %23 = sbr.rel (0) target = $region13
    $region12: #{tem_cnn_global_forward.1} parent=1 // pred_region
      %s25 = ssub.s32 16, 16
      %26 = vsyncadd [#allocation5], %s25
      %s28 = sshll.u32 %s2, 4
      %s29 = int_to_ptr.vmem [resolvable:$true] %s28
      %31 = dma.vmem_to_smem %s29, 16, [#allocation4], [#allocation5]
    $region13: #{tem_cnn_global_forward.1} parent=1 // pred_fallthru
      _
    // Predicated region
    $region14: #{tem_cnn_global_forward.1} parent=1 // pred_check
      _
    $region15: #{tem_cnn_global_forward.1} parent=1 // pred_check_branch
      %33 = sbr.rel (0) target = $region17
    $region16: #{tem_cnn_global_forward.1} parent=1 // pred_region
      %34 = dma.done [#allocation3], 16
    $region17: #{tem_cnn_global_forward.1} parent=1 // pred_fallthru
      _
    // Predicated region
    $region18: #{tem_cnn_global_forward.1} parent=1 // pred_check
      _
    $region19: #{tem_cnn_global_forward.1} parent=1 // pred_check_branch
      %36 = sbr.rel (0) target = $region21
    $region20: #{tem_cnn_global_forward.1} parent=1 // pred_region
      %37 = dma.done [#allocation5], 16
    $region21: #{tem_cnn_global_forward.1} parent=1 // pred_fallthru
      _
    %38 = sfence
    %v39 = vld [vmem:[%s0] sm:$0xff]
    %s40 = scalar_lea.vmem %s0, 8
    %v41 = vld [vmem:[%s40] sm:$0xff]
    %s42 = scalar_lea.vmem %s0, 16
    %v43 = vld [vmem:[%s42] sm:$0xff]
    %s44 = scalar_lea.vmem %s0, 24
    %v45 = vld [vmem:[%s44] sm:$0xff]
    %s46 = sld [smem:[#allocation2]]
    %v47 = vstv %s46
    %v48 = vmul.f32 %v47, %v39
    %v49 = vadd.f32 %v48, 0.0
    %s50 = sld [smem:[#allocation2 + $0x1]]
    %v51 = vstv %s50
    %v52 = vmul.f32 %v51, %v39
    %v54 = vrot.slane %v52, 1
    %v56 = vadd.f32 %v49, %v54
    %s57 = sld [smem:[#allocation2 + $0x2]]
    %v58 = vstv %s57
    %v59 = vmul.f32 %v58, %v39
    %v61 = vrot.slane %v59, 2
    %v63 = vadd.f32 %v56, %v61
    %s64 = sld [smem:[#allocation2 + $0x3]]
    %v65 = vstv %s64
    %v66 = vmul.f32 %v65, %v41
    %v67 = vadd.f32 %v63, %v66
    %s68 = sld [smem:[#allocation2 + $0x4]]
    %v69 = vstv %s68
    %v70 = vmul.f32 %v69, %v41
    %v72 = vrot.slane %v70, 1
    %v74 = vadd.f32 %v67, %v72
    %s75 = sld [smem:[#allocation2 + $0x5]]
    %v76 = vstv %s75
    %v77 = vmul.f32 %v76, %v41
    %v79 = vrot.slane %v77, 2
    %v81 = vadd.f32 %v74, %v79
    %s82 = sld [smem:[#allocation2 + $0x6]]
    %v83 = vstv %s82
    %v84 = vmul.f32 %v83, %v43
    %v85 = vadd.f32 %v81, %v84
    %s86 = sld [smem:[#allocation2 + $0x7]]
    %v87 = vstv %s86
    %v88 = vmul.f32 %v87, %v43
    %v90 = vrot.slane %v88, 1
    %v92 = vadd.f32 %v85, %v90
    %s93 = sld [smem:[#allocation2 + $0x8]]
    %v94 = vstv %s93
    %v95 = vmul.f32 %v94, %v43
    %v97 = vrot.slane %v95, 2
    %v99 = vadd.f32 %v92, %v97
    %s100 = sld [smem:[#allocation2 + $0x9]]
    %v101 = vstv %s100
    %v102 = vmul.f32 %v101, %v45
    %v103 = vadd.f32 %v99, %v102
    %s104 = sld [smem:[#allocation2 + $0xa]]
    %v105 = vstv %s104
    %v106 = vmul.f32 %v105, %v45
    %v108 = vrot.slane %v106, 1
    %v110 = vadd.f32 %v103, %v108
    %s111 = sld [smem:[#allocation2 + $0xb]]
    %v112 = vstv %s111
    %v113 = vmul.f32 %v112, %v45
    %v115 = vrot.slane %v113, 2
    %v117 = vadd.f32 %v110, %v115
    %s118 = sld [smem:[#allocation4]]
    %v119 = vstv %s118
    %v120 = vadd.f32 %v117, %v119
    %vm121 = vcmp.ge.f32.partialorder %v120, 0.0
    %v122 = vmul.f32 %v120, 0.01
    %v123 = vsel %vm121, %v120, %v122
    %124 = vst [vmem:[%s3] sm:$0x3f] %v123
    %s125 = sld [smem:[#allocation2 + $0xc]]
    %v126 = vstv %s125
    %v127 = vmul.f32 %v126, %v39
    %v128 = vadd.f32 %v127, 0.0
    %s129 = sld [smem:[#allocation2 + $0xd]]
    %v130 = vstv %s129
    %v131 = vmul.f32 %v130, %v39
    %v133 = vrot.slane %v131, 1
    %v135 = vadd.f32 %v128, %v133
    %s136 = sld [smem:[#allocation2 + $0xe]]
    %v137 = vstv %s136
    %v138 = vmul.f32 %v137, %v39
    %v140 = vrot.slane %v138, 2
    %v142 = vadd.f32 %v135, %v140
    %s143 = sld [smem:[#allocation2 + $0xf]]
    %v144 = vstv %s143
    %v145 = vmul.f32 %v144, %v41
    %v146 = vadd.f32 %v142, %v145
    %s147 = sld [smem:[#allocation2 + $0x10]]
    %v148 = vstv %s147
    %v149 = vmul.f32 %v148, %v41
    %v151 = vrot.slane %v149, 1
    %v153 = vadd.f32 %v146, %v151
    %s154 = sld [smem:[#allocation2 + $0x11]]
    %v155 = vstv %s154
    %v156 = vmul.f32 %v155, %v41
    %v158 = vrot.slane %v156, 2
    %v160 = vadd.f32 %v153, %v158
    %s161 = sld [smem:[#allocation2 + $0x12]]
    %v162 = vstv %s161
    %v163 = vmul.f32 %v162, %v43
    %v164 = vadd.f32 %v160, %v163
    %s165 = sld [smem:[#allocation2 + $0x13]]
    %v166 = vstv %s165
    %v167 = vmul.f32 %v166, %v43
    %v169 = vrot.slane %v167, 1
    %v171 = vadd.f32 %v164, %v169
    %s172 = sld [smem:[#allocation2 + $0x14]]
    %v173 = vstv %s172
    %v174 = vmul.f32 %v173, %v43
    %v176 = vrot.slane %v174, 2
    %v178 = vadd.f32 %v171, %v176
    %s179 = sld [smem:[#allocation2 + $0x15]]
    %v180 = vstv %s179
    %v181 = vmul.f32 %v180, %v45
    %v182 = vadd.f32 %v178, %v181
    %s183 = sld [smem:[#allocation2 + $0x16]]
    %v184 = vstv %s183
    %v185 = vmul.f32 %v184, %v45
    %v187 = vrot.slane %v185, 1
    %v189 = vadd.f32 %v182, %v187
    %s190 = sld [smem:[#allocation2 + $0x17]]
    %v191 = vstv %s190
    %v192 = vmul.f32 %v191, %v45
    %v194 = vrot.slane %v192, 2
    %v196 = vadd.f32 %v189, %v194
    %s197 = sld [smem:[#allocation4 + $0x1]]
    %v198 = vstv %s197
    %v199 = vadd.f32 %v196, %v198
    %vm200 = vcmp.ge.f32.partialorder %v199, 0.0
    %v201 = vmul.f32 %v199, 0.01
    %v202 = vsel %vm200, %v199, %v201
    %s203 = scalar_lea.vmem %s3, 8
    %204 = vst [vmem:[%s203] sm:$0x3f] %v202
    %s205 = sld [smem:[#allocation2 + $0x18]]
    %v206 = vstv %s205
    %v207 = vmul.f32 %v206, %v39
    %v208 = vadd.f32 %v207, 0.0
    %s209 = sld [smem:[#allocation2 + $0x19]]
    %v210 = vstv %s209
    %v211 = vmul.f32 %v210, %v39
    %v213 = vrot.slane %v211, 1
    %v215 = vadd.f32 %v208, %v213
    %s216 = sld [smem:[#allocation2 + $0x1a]]
    %v217 = vstv %s216
    %v218 = vmul.f32 %v217, %v39
    %v220 = vrot.slane %v218, 2
    %v222 = vadd.f32 %v215, %v220
    %s223 = sld [smem:[#allocation2 + $0x1b]]
    %v224 = vstv %s223
    %v225 = vmul.f32 %v224, %v41
    %v226 = vadd.f32 %v222, %v225
    %s227 = sld [smem:[#allocation2 + $0x1c]]
    %v228 = vstv %s227
    %v229 = vmul.f32 %v228, %v41
    %v231 = vrot.slane %v229, 1
    %v233 = vadd.f32 %v226, %v231
    %s234 = sld [smem:[#allocation2 + $0x1d]]
    %v235 = vstv %s234
    %v236 = vmul.f32 %v235, %v41
    %v238 = vrot.slane %v236, 2
    %v240 = vadd.f32 %v233, %v238
    %s241 = sld [smem:[#allocation2 + $0x1e]]
    %v242 = vstv %s241
    %v243 = vmul.f32 %v242, %v43
    %v244 = vadd.f32 %v240, %v243
    %s245 = sld [smem:[#allocation2 + $0x1f]]
    %v246 = vstv %s245
    %v247 = vmul.f32 %v246, %v43
    %v249 = vrot.slane %v247, 1
    %v251 = vadd.f32 %v244, %v249
    %s252 = sld [smem:[#allocation2 + $0x20]]
    %v253 = vstv %s252
    %v254 = vmul.f32 %v253, %v43
    %v256 = vrot.slane %v254, 2
    %v258 = vadd.f32 %v251, %v256
    %s259 = sld [smem:[#allocation2 + $0x21]]
    %v260 = vstv %s259
    %v261 = vmul.f32 %v260, %v45
    %v262 = vadd.f32 %v258, %v261
    %s263 = sld [smem:[#allocation2 + $0x22]]
    %v264 = vstv %s263
    %v265 = vmul.f32 %v264, %v45
    %v267 = vrot.slane %v265, 1
    %v269 = vadd.f32 %v262, %v267
    %s270 = sld [smem:[#allocation2 + $0x23]]
    %v271 = vstv %s270
    %v272 = vmul.f32 %v271, %v45
    %v274 = vrot.slane %v272, 2
    %v276 = vadd.f32 %v269, %v274
    %s277 = sld [smem:[#allocation4 + $0x2]]
    %v278 = vstv %s277
    %v279 = vadd.f32 %v276, %v278
    %vm280 = vcmp.ge.f32.partialorder %v279, 0.0
    %v281 = vmul.f32 %v279, 0.01
    %v282 = vsel %vm280, %v279, %v281
    %s283 = scalar_lea.vmem %s3, 16
    %284 = vst [vmem:[%s283] sm:$0x3f] %v282
    %s285 = sld [smem:[#allocation2 + $0x24]]
    %v286 = vstv %s285
    %v287 = vmul.f32 %v286, %v39
    %v288 = vadd.f32 %v287, 0.0
    %s289 = sld [smem:[#allocation2 + $0x25]]
    %v290 = vstv %s289
    %v291 = vmul.f32 %v290, %v39
    %v293 = vrot.slane %v291, 1
    %v295 = vadd.f32 %v288, %v293
    %s296 = sld [smem:[#allocation2 + $0x26]]
    %v297 = vstv %s296
    %v298 = vmul.f32 %v297, %v39
    %v300 = vrot.slane %v298, 2
    %v302 = vadd.f32 %v295, %v300
    %s303 = sld [smem:[#allocation2 + $0x27]]
    %v304 = vstv %s303
    %v305 = vmul.f32 %v304, %v41
    %v306 = vadd.f32 %v302, %v305
    %s307 = sld [smem:[#allocation2 + $0x28]]
    %v308 = vstv %s307
    %v309 = vmul.f32 %v308, %v41
    %v311 = vrot.slane %v309, 1
    %v313 = vadd.f32 %v306, %v311
    %s314 = sld [smem:[#allocation2 + $0x29]]
    %v315 = vstv %s314
    %v316 = vmul.f32 %v315, %v41
    %v318 = vrot.slane %v316, 2
    %v320 = vadd.f32 %v313, %v318
    %s321 = sld [smem:[#allocation2 + $0x2a]]
    %v322 = vstv %s321
    %v323 = vmul.f32 %v322, %v43
    %v324 = vadd.f32 %v320, %v323
    %s325 = sld [smem:[#allocation2 + $0x2b]]
    %v326 = vstv %s325
    %v327 = vmul.f32 %v326, %v43
    %v329 = vrot.slane %v327, 1
    %v331 = vadd.f32 %v324, %v329
    %s332 = sld [smem:[#allocation2 + $0x2c]]
    %v333 = vstv %s332
    %v334 = vmul.f32 %v333, %v43
    %v336 = vrot.slane %v334, 2
    %v338 = vadd.f32 %v331, %v336
    %s339 = sld [smem:[#allocation2 + $0x2d]]
    %v340 = vstv %s339
    %v341 = vmul.f32 %v340, %v45
    %v342 = vadd.f32 %v338, %v341
    %s343 = sld [smem:[#allocation2 + $0x2e]]
    %v344 = vstv %s343
    %v345 = vmul.f32 %v344, %v45
    %v347 = vrot.slane %v345, 1
    %v349 = vadd.f32 %v342, %v347
    %s350 = sld [smem:[#allocation2 + $0x2f]]
    %v351 = vstv %s350
    %v352 = vmul.f32 %v351, %v45
    %v354 = vrot.slane %v352, 2
    %v356 = vadd.f32 %v349, %v354
    %s357 = sld [smem:[#allocation4 + $0x3]]
    %v358 = vstv %s357
    %v359 = vadd.f32 %v356, %v358
    %vm360 = vcmp.ge.f32.partialorder %v359, 0.0
    %v361 = vmul.f32 %v359, 0.01
    %v362 = vsel %vm360, %v359, %v361
    %s363 = scalar_lea.vmem %s3, 24
    %364 = vst [vmem:[%s363] sm:$0x3f] %v362
    %s365 = sld [smem:[#allocation2 + $0x30]]
    %v366 = vstv %s365
    %v367 = vmul.f32 %v366, %v39
    %v368 = vadd.f32 %v367, 0.0
    %s369 = sld [smem:[#allocation2 + $0x31]]
    %v370 = vstv %s369
    %v371 = vmul.f32 %v370, %v39
    %v373 = vrot.slane %v371, 1
    %v375 = vadd.f32 %v368, %v373
    %s376 = sld [smem:[#allocation2 + $0x32]]
    %v377 = vstv %s376
    %v378 = vmul.f32 %v377, %v39
    %v380 = vrot.slane %v378, 2
    %v382 = vadd.f32 %v375, %v380
    %s383 = sld [smem:[#allocation2 + $0x33]]
    %v384 = vstv %s383
    %v385 = vmul.f32 %v384, %v41
    %v386 = vadd.f32 %v382, %v385
    %s387 = sld [smem:[#allocation2 + $0x34]]
    %v388 = vstv %s387
    %v389 = vmul.f32 %v388, %v41
    %v391 = vrot.slane %v389, 1
    %v393 = vadd.f32 %v386, %v391
    %s394 = sld [smem:[#allocation2 + $0x35]]
    %v395 = vstv %s394
    %v396 = vmul.f32 %v395, %v41
    %v398 = vrot.slane %v396, 2
    %v400 = vadd.f32 %v393, %v398
    %s401 = sld [smem:[#allocation2 + $0x36]]
    %v402 = vstv %s401
    %v403 = vmul.f32 %v402, %v43
    %v404 = vadd.f32 %v400, %v403
    %s405 = sld [smem:[#allocation2 + $0x37]]
    %v406 = vstv %s405
    %v407 = vmul.f32 %v406, %v43
    %v409 = vrot.slane %v407, 1
    %v411 = vadd.f32 %v404, %v409
    %s412 = sld [smem:[#allocation2 + $0x38]]
    %v413 = vstv %s412
    %v414 = vmul.f32 %v413, %v43
    %v416 = vrot.slane %v414, 2
    %v418 = vadd.f32 %v411, %v416
    %s419 = sld [smem:[#allocation2 + $0x39]]
    %v420 = vstv %s419
    %v421 = vmul.f32 %v420, %v45
    %v422 = vadd.f32 %v418, %v421
    %s423 = sld [smem:[#allocation2 + $0x3a]]
    %v424 = vstv %s423
    %v425 = vmul.f32 %v424, %v45
    %v427 = vrot.slane %v425, 1
    %v429 = vadd.f32 %v422, %v427
    %s430 = sld [smem:[#allocation2 + $0x3b]]
    %v431 = vstv %s430
    %v432 = vmul.f32 %v431, %v45
    %v434 = vrot.slane %v432, 2
    %v436 = vadd.f32 %v429, %v434
    %s437 = sld [smem:[#allocation4 + $0x4]]
    %v438 = vstv %s437
    %v439 = vadd.f32 %v436, %v438
    %vm440 = vcmp.ge.f32.partialorder %v439, 0.0
    %v441 = vmul.f32 %v439, 0.01
    %v442 = vsel %vm440, %v439, %v441
    %s443 = scalar_lea.vmem %s3, 32
    %444 = vst [vmem:[%s443] sm:$0x3f] %v442
    %s445 = sld [smem:[#allocation2 + $0x3c]]
    %v446 = vstv %s445
    %v447 = vmul.f32 %v446, %v39
    %v448 = vadd.f32 %v447, 0.0
    %s449 = sld [smem:[#allocation2 + $0x3d]]
    %v450 = vstv %s449
    %v451 = vmul.f32 %v450, %v39
    %v453 = vrot.slane %v451, 1
    %v455 = vadd.f32 %v448, %v453
    %s456 = sld [smem:[#allocation2 + $0x3e]]
    %v457 = vstv %s456
    %v458 = vmul.f32 %v457, %v39
    %v460 = vrot.slane %v458, 2
    %v462 = vadd.f32 %v455, %v460
    %s463 = sld [smem:[#allocation2 + $0x3f]]
    %v464 = vstv %s463
    %v465 = vmul.f32 %v464, %v41
    %v466 = vadd.f32 %v462, %v465
    %s467 = sld [smem:[#allocation2 + $0x40]]
    %v468 = vstv %s467
    %v469 = vmul.f32 %v468, %v41
    %v471 = vrot.slane %v469, 1
    %v473 = vadd.f32 %v466, %v471
    %s474 = sld [smem:[#allocation2 + $0x41]]
    %v475 = vstv %s474
    %v476 = vmul.f32 %v475, %v41
    %v478 = vrot.slane %v476, 2
    %v480 = vadd.f32 %v473, %v478
    %s481 = sld [smem:[#allocation2 + $0x42]]
    %v482 = vstv %s481
    %v483 = vmul.f32 %v482, %v43
    %v484 = vadd.f32 %v480, %v483
    %s485 = sld [smem:[#allocation2 + $0x43]]
    %v486 = vstv %s485
    %v487 = vmul.f32 %v486, %v43
    %v489 = vrot.slane %v487, 1
    %v491 = vadd.f32 %v484, %v489
    %s492 = sld [smem:[#allocation2 + $0x44]]
    %v493 = vstv %s492
    %v494 = vmul.f32 %v493, %v43
    %v496 = vrot.slane %v494, 2
    %v498 = vadd.f32 %v491, %v496
    %s499 = sld [smem:[#allocation2 + $0x45]]
    %v500 = vstv %s499
    %v501 = vmul.f32 %v500, %v45
    %v502 = vadd.f32 %v498, %v501
    %s503 = sld [smem:[#allocation2 + $0x46]]
    %v504 = vstv %s503
    %v505 = vmul.f32 %v504, %v45
    %v507 = vrot.slane %v505, 1
    %v509 = vadd.f32 %v502, %v507
    %s510 = sld [smem:[#allocation2 + $0x47]]
    %v511 = vstv %s510
    %v512 = vmul.f32 %v511, %v45
    %v514 = vrot.slane %v512, 2
    %v516 = vadd.f32 %v509, %v514
    %s517 = sld [smem:[#allocation4 + $0x5]]
    %v518 = vstv %s517
    %v519 = vadd.f32 %v516, %v518
    %vm520 = vcmp.ge.f32.partialorder %v519, 0.0
    %v521 = vmul.f32 %v519, 0.01
    %v522 = vsel %vm520, %v519, %v521
    %s523 = scalar_lea.vmem %s3, 40
    %524 = vst [vmem:[%s523] sm:$0x3f] %v522
    %s525 = sld [smem:[#allocation2 + $0x48]]
    %v526 = vstv %s525
    %v527 = vmul.f32 %v526, %v39
    %v528 = vadd.f32 %v527, 0.0
    %s529 = sld [smem:[#allocation2 + $0x49]]
    %v530 = vstv %s529
    %v531 = vmul.f32 %v530, %v39
    %v533 = vrot.slane %v531, 1
    %v535 = vadd.f32 %v528, %v533
    %s536 = sld [smem:[#allocation2 + $0x4a]]
    %v537 = vstv %s536
    %v538 = vmul.f32 %v537, %v39
    %v540 = vrot.slane %v538, 2
    %v542 = vadd.f32 %v535, %v540
    %s543 = sld [smem:[#allocation2 + $0x4b]]
    %v544 = vstv %s543
    %v545 = vmul.f32 %v544, %v41
    %v546 = vadd.f32 %v542, %v545
    %s547 = sld [smem:[#allocation2 + $0x4c]]
    %v548 = vstv %s547
    %v549 = vmul.f32 %v548, %v41
    %v551 = vrot.slane %v549, 1
    %v553 = vadd.f32 %v546, %v551
    %s554 = sld [smem:[#allocation2 + $0x4d]]
    %v555 = vstv %s554
    %v556 = vmul.f32 %v555, %v41
    %v558 = vrot.slane %v556, 2
    %v560 = vadd.f32 %v553, %v558
    %s561 = sld [smem:[#allocation2 + $0x4e]]
    %v562 = vstv %s561
    %v563 = vmul.f32 %v562, %v43
    %v564 = vadd.f32 %v560, %v563
    %s565 = sld [smem:[#allocation2 + $0x4f]]
    %v566 = vstv %s565
    %v567 = vmul.f32 %v566, %v43
    %v569 = vrot.slane %v567, 1
    %v571 = vadd.f32 %v564, %v569
    %s572 = sld [smem:[#allocation2 + $0x50]]
    %v573 = vstv %s572
    %v574 = vmul.f32 %v573, %v43
    %v576 = vrot.slane %v574, 2
    %v578 = vadd.f32 %v571, %v576
    %s579 = sld [smem:[#allocation2 + $0x51]]
    %v580 = vstv %s579
    %v581 = vmul.f32 %v580, %v45
    %v582 = vadd.f32 %v578, %v581
    %s583 = sld [smem:[#allocation2 + $0x52]]
    %v584 = vstv %s583
    %v585 = vmul.f32 %v584, %v45
    %v587 = vrot.slane %v585, 1
    %v589 = vadd.f32 %v582, %v587
    %s590 = sld [smem:[#allocation2 + $0x53]]
    %v591 = vstv %s590
    %v592 = vmul.f32 %v591, %v45
    %v594 = vrot.slane %v592, 2
    %v596 = vadd.f32 %v589, %v594
    %s597 = sld [smem:[#allocation4 + $0x6]]
    %v598 = vstv %s597
    %v599 = vadd.f32 %v596, %v598
    %vm600 = vcmp.ge.f32.partialorder %v599, 0.0
    %v601 = vmul.f32 %v599, 0.01
    %v602 = vsel %vm600, %v599, %v601
    %s603 = scalar_lea.vmem %s3, 48
    %604 = vst [vmem:[%s603] sm:$0x3f] %v602
    %s605 = sld [smem:[#allocation2 + $0x54]]
    %v606 = vstv %s605
    %v607 = vmul.f32 %v606, %v39
    %v608 = vadd.f32 %v607, 0.0
    %s609 = sld [smem:[#allocation2 + $0x55]]
    %v610 = vstv %s609
    %v611 = vmul.f32 %v610, %v39
    %v613 = vrot.slane %v611, 1
    %v615 = vadd.f32 %v608, %v613
    %s616 = sld [smem:[#allocation2 + $0x56]]
    %v617 = vstv %s616
    %v618 = vmul.f32 %v617, %v39
    %v620 = vrot.slane %v618, 2
    %v622 = vadd.f32 %v615, %v620
    %s623 = sld [smem:[#allocation2 + $0x57]]
    %v624 = vstv %s623
    %v625 = vmul.f32 %v624, %v41
    %v626 = vadd.f32 %v622, %v625
    %s627 = sld [smem:[#allocation2 + $0x58]]
    %v628 = vstv %s627
    %v629 = vmul.f32 %v628, %v41
    %v631 = vrot.slane %v629, 1
    %v633 = vadd.f32 %v626, %v631
    %s634 = sld [smem:[#allocation2 + $0x59]]
    %v635 = vstv %s634
    %v636 = vmul.f32 %v635, %v41
    %v638 = vrot.slane %v636, 2
    %v640 = vadd.f32 %v633, %v638
    %s641 = sld [smem:[#allocation2 + $0x5a]]
    %v642 = vstv %s641
    %v643 = vmul.f32 %v642, %v43
    %v644 = vadd.f32 %v640, %v643
    %s645 = sld [smem:[#allocation2 + $0x5b]]
    %v646 = vstv %s645
    %v647 = vmul.f32 %v646, %v43
    %v649 = vrot.slane %v647, 1
    %v651 = vadd.f32 %v644, %v649
    %s652 = sld [smem:[#allocation2 + $0x5c]]
    %v653 = vstv %s652
    %v654 = vmul.f32 %v653, %v43
    %v656 = vrot.slane %v654, 2
    %v658 = vadd.f32 %v651, %v656
    %s659 = sld [smem:[#allocation2 + $0x5d]]
    %v660 = vstv %s659
    %v661 = vmul.f32 %v660, %v45
    %v662 = vadd.f32 %v658, %v661
    %s663 = sld [smem:[#allocation2 + $0x5e]]
    %v664 = vstv %s663
    %v665 = vmul.f32 %v664, %v45
    %v667 = vrot.slane %v665, 1
    %v669 = vadd.f32 %v662, %v667
    %s670 = sld [smem:[#allocation2 + $0x5f]]
    %v671 = vstv %s670
    %v672 = vmul.f32 %v671, %v45
    %v674 = vrot.slane %v672, 2
    %v676 = vadd.f32 %v669, %v674
    %s677 = sld [smem:[#allocation4 + $0x7]]
    %v678 = vstv %s677
    %v679 = vadd.f32 %v676, %v678
    %vm680 = vcmp.ge.f32.partialorder %v679, 0.0
    %v681 = vmul.f32 %v679, 0.01
    %v682 = vsel %vm680, %v679, %v681
    %s683 = scalar_lea.vmem %s3, 56
    %684 = vst [vmem:[%s683] sm:$0x3f] %v682
    // Predicated region
    $region22: #{tem_cnn_global_forward.1} parent=1 // pred_check
      _
    $region23: #{tem_cnn_global_forward.1} parent=1 // pred_check_branch
      %686 = sbr.rel (0) target = $region25
    $region24: #{tem_cnn_global_forward.1} parent=1 // pred_region
      _
    $region25: #{tem_cnn_global_forward.1} parent=1 // pred_fallthru
      _
    // Predicated region
    $region26: #{tem_cnn_global_forward.1} parent=1 // pred_check
      _
    $region27: #{tem_cnn_global_forward.1} parent=1 // pred_check_branch
      %688 = sbr.rel (0) target = $region29
    $region28: #{tem_cnn_global_forward.1} parent=1 // pred_region
      _
    $region29: #{tem_cnn_global_forward.1} parent=1 // pred_fallthru
      _
    %689 = vsyncpa [#allocation3], 1
    %690 = vsyncpa [#allocation5], 1

</llo_original>
